<compile_context>
chip_gen: v5e
topology: v5e:2x2
jax: 0.10.0
libtpu: 0.0.40
codegen_flags: <defaults>
</compile_context>

<pallas_src>
import jax
import jax.numpy as jnp
from jax.experimental import pallas as pl
from jax.experimental.pallas import tpu as pltpu


# ----------------------------------------------------------------------------
# Fused Pallas kernel: conv3x3(C->1, SAME, no bias) + sigmoid + nearest upsample
# (lane-dense flattened output) + softmax over the class logits.
# One grid step processes Nb images (batch-blocked, "parallel" axis).
# ----------------------------------------------------------------------------
def _liveness_head_kernel(feat_ref, w_ref, b_ref, cls_ref, depth_ref, prob_ref, xp_ref):
    # feat_ref : (Nb, H, W, C)        feature-map block (VMEM)
    # w_ref    : (3, 3, C)            depth_final conv weight (1 out ch, no bias)
    # b_ref    : (H, W, OH*OW)        grid-invariant upsample+flatten matrix
    # cls_ref  : (Nb, 1, K)           classifier logits
    # depth_ref: (Nb, 1, OH*OW)       lane-dense flattened depth map
    # prob_ref : (Nb, 1, K)           softmax(cls) (eval path)
    # xp_ref   : (Nb, H+2, W+2, C)    VMEM scratch: zero-padded feature block
    Nb, H, W, C = feat_ref.shape

    # ---- SAME padding: zero ONLY the 1-wide border, then write the interior ----
    # (The interior write covers exactly [:, 1:H+1, 1:W+1, :] every step, so no
    # full-scratch zero is needed.  Border zeroed per step for megacore safety.)
    zrow = jnp.zeros((Nb, 1, W + 2, C), jnp.float32)
    zcol = jnp.zeros((Nb, H + 2, 1, C), jnp.float32)
    xp_ref[:, 0:1, :, :] = zrow
    xp_ref[:, H + 1:H + 2, :, :] = zrow
    xp_ref[:, :, 0:1, :] = zcol
    xp_ref[:, :, W + 1:W + 2, :] = zcol
    xp_ref[:, 1:H + 1, 1:W + 1, :] = feat_ref[...].astype(jnp.float32)

    xp = xp_ref[...]
    w = w_ref[...].astype(jnp.float32)

    # ---- 3x3 conv: 9 taps accumulate in (Nb,H,W,C); init from tap (0,0);
    #      ONE cross-lane channel reduction at the end ----
    acc = xp[:, 0:H, 0:W, :] * w[0, 0, :]
    for dh in range(3):
        for dw in range(3):
            if dh == 0 and dw == 0:
                continue
            acc = acc + xp[:, dh:dh + H, dw:dw + W, :] * w[dh, dw, :]
    d = jax.nn.sigmoid(jnp.sum(acc, axis=-1))                 # (Nb, H, W)

    # ---- nearest upsample fused with the flatten:
    #      out[n, r*OW + c] = sum_{h,w} d[n,h,w] * B[h, w, r*OW + c]
    # B is 0/1 with exactly one hit per output -> exact gather, produced
    # directly in lane-dense layout via tiny MXU matmuls (no reshape needed).
    bmat = b_ref[...]                                          # (H, W, OH*OW)
    for n in range(Nb):                                        # static unroll (Nb small)
        d_n = d[n]                                             # (H, W)
        o_n = jnp.dot(d_n[0:1, :], bmat[0], preferred_element_type=jnp.float32)
        for h in range(1, H):
            o_n = o_n + jnp.dot(d_n[h:h + 1, :], bmat[h],
                                preferred_element_type=jnp.float32)
        depth_ref[n] = o_n                                     # (1, OH*OW), unmasked vst

    # ---- eval-path softmax over class logits (fused; no extra launch) ----
    logits = cls_ref[...].astype(jnp.float32)                  # (Nb, 1, K)
    m = jnp.max(logits, axis=-1, keepdims=True)
    e = jnp.exp(logits - m)
    # approx=True would route to EUP but break the 1e-5 parity check; keep exact.
    prob_ref[...] = e * pl.reciprocal(jnp.sum(e, axis=-1, keepdims=True), approx=False)


def _pick_block_batch(n, max_nb=8):
    """Largest Nb <= max_nb dividing n while keeping grid = n/Nb >= 2."""
    best = 1
    for d in range(1, min(n, max_nb) + 1):
        if n % d == 0 and n // d >= 2:
            best = d
    return best


def liveness_head_pallas(feat_nhwc, w_hwc, cls_logits, depth_size, block_batch=None):
    """feat_nhwc: (N,H,W,C) f32; w_hwc: (3,3,C); cls_logits: (N,K).
    Returns (cls_probs (N,K), depth (N,out_h,out_w))."""
    N, H, W, C = feat_nhwc.shape
    K = cls_logits.shape[-1]
    out_h, out_w = depth_size
    kout = out_h * out_w

    nb = _pick_block_batch(N) if block_batch is None else block_batch
    grid = (N // nb,)

    # Grid-invariant nearest-upsample + flatten matrix, hoisted out of the kernel:
    # B[h, w, r*out_w + c] = 1 iff h == floor(r*H/out_h) and w == floor(c*W/out_w).
    src_h = (jnp.arange(out_h) * H) // out_h
    src_w = (jnp.arange(out_w) * W) // out_w
    sel_h = (jnp.arange(H)[:, None] == src_h[None, :]).astype(jnp.float32)   # (H, out_h)
    sel_w = (jnp.arange(W)[:, None] == src_w[None, :]).astype(jnp.float32)   # (W, out_w)
    bmat = (sel_h[:, None, :, None] * sel_w[None, :, None, :]).reshape(H, W, kout)

    cls3 = cls_logits.reshape(N, 1, K)

    depth_flat, probs = pl.pallas_call(
        _liveness_head_kernel,
        out_shape=(
            jax.ShapeDtypeStruct((N, 1, kout), jnp.float32),   # lane-dense depth
            jax.ShapeDtypeStruct((N, 1, K), jnp.float32),
        ),
        grid_spec=pltpu.PrefetchScalarGridSpec(
            num_scalar_prefetch=0,
            grid=grid,                                         # batch-blocked, parallel
            in_specs=[
                pl.BlockSpec((nb, H, W, C), lambda b: (b, 0, 0, 0)),
                pl.BlockSpec((3, 3, C), lambda b: (0, 0, 0)),        # pinned weight
                pl.BlockSpec((H, W, kout), lambda b: (0, 0, 0)),     # pinned upsample mat
                pl.BlockSpec((nb, 1, K), lambda b: (b, 0, 0)),
            ],
            out_specs=[
                pl.BlockSpec((nb, 1, kout), lambda b: (b, 0, 0)),
                pl.BlockSpec((nb, 1, K), lambda b: (b, 0, 0)),
            ],
            scratch_shapes=[pltpu.VMEM((nb, H + 2, W + 2, C), jnp.float32)],
        ),
        compiler_params=pltpu.CompilerParams(
            dimension_semantics=("parallel",),
            vmem_limit_bytes=32 * 1024 * 1024,   # re-derive for production shapes (v7x: 64 MiB phys)
        ),
    )(feat_nhwc, w_hwc, bmat, cls3)

    return probs.reshape(N, K), depth_flat.reshape(N, out_h, out_w)


# ----------------------------------------------------------------------------
# Liveness module (eval mode).  Backbone is a deterministic synthetic stand-in.
# ----------------------------------------------------------------------------
class LivenessPallas:
    # TODO(synk): the real backbones (MobileNet/ResNet/Inception/Swin/...) are not
    # reproduced; replaced by a deterministic synthetic stand-in that emits
    # (cls_out, NHWC conv_features) with the same interface.
    def __init__(self, key, in_ch=3, feat_ch=32, depth_size=(14, 14)):
        self.depth_size = tuple(depth_size)
        k1, k2, k3, _ = jax.random.split(key, 4)
        # synthetic backbone params
        self.w_pw = jax.random.normal(k1, (in_ch, feat_ch), jnp.float32) * 0.1
        self.b_pw = jnp.zeros((feat_ch,), jnp.float32)
        self.w_cls = jax.random.normal(k2, (feat_ch, 2), jnp.float32) * 0.1
        self.b_cls = jnp.zeros((2,), jnp.float32)
        # depth_final weight, PyTorch layout (O=1, I=C, kH=3, kW=3), no bias
        self.w_depth_oihw = jax.random.normal(k3, (1, feat_ch, 3, 3), jnp.float32) * 0.05
        # kernel layout (3, 3, C)
        self.w_depth_hwc = jnp.transpose(self.w_depth_oihw[0], (1, 2, 0))

    def _backbone(self, x_nchw):
        # pointwise conv + relu + 2x2 avg-pool; emits NHWC directly (no NCHW round trip)
        x = jnp.transpose(x_nchw, (0, 2, 3, 1))                       # NHWC
        f = jax.nn.relu(jnp.einsum('nhwc,cd->nhwd', x, self.w_pw) + self.b_pw)
        N, H, W, C = f.shape
        f = f.reshape(N, H // 2, 2, W // 2, 2, C).mean(axis=(2, 4))   # (N, H/2, W/2, C)
        cls_out = f.mean(axis=(1, 2)) @ self.w_cls + self.b_cls       # (N, 2)
        return cls_out, f

    def __call__(self, x_nchw):
        cls_out, feat_nhwc = self._backbone(x_nchw)
        cls_probs, depth = liveness_head_pallas(
            feat_nhwc, self.w_depth_hwc, cls_out, self.depth_size)
        return cls_probs, depth


# ----------------------------------------------------------------------------
# Pure-JAX reference for the head (sanity check)
# ----------------------------------------------------------------------------
def _reference(model, x_nchw):
    cls_out, feat_nhwc = model._backbone(x_nchw)
    feat_nchw = jnp.transpose(feat_nhwc, (0, 3, 1, 2))
    dm = jax.lax.conv_general_dilated(
        feat_nchw, model.w_depth_oihw, window_strides=(1, 1), padding='SAME',
        dimension_numbers=('NCHW', 'OIHW', 'NCHW'))
    dm = jax.nn.sigmoid(dm)
    h, w = dm.shape[2], dm.shape[3]
    out_h, out_w = model.depth_size
    idx_h = (jnp.arange(out_h) * h) // out_h
    idx_w = (jnp.arange(out_w) * w) // out_w
    dm = dm[:, :, idx_h, :][:, :, :, idx_w]
    dm = jnp.squeeze(dm, axis=1)
    return jax.nn.softmax(cls_out, axis=-1), dm


if __name__ == "__main__":
    key = jax.random.PRNGKey(0)
    k_param, k_x = jax.random.split(key)
    # small shapes: batch=4 (-> Nb=2 images per grid step, grid=2), 3 input
    # channels, 14x14 image -> 7x7x32 features, depth_size (14,14)
    x = jax.random.normal(k_x, (4, 3, 14, 14), jnp.float32)

    model = LivenessPallas(k_param, in_ch=3, feat_ch=32, depth_size=(14, 14))

    cls_probs, depth_map = model(x)
    cls_probs = jax.block_until_ready(cls_probs)
    depth_map = jax.block_until_ready(depth_map)

    ref_cls, ref_depth = _reference(model, x)
    assert cls_probs.shape == (4, 2)
    assert depth_map.shape == (4, 14, 14)
    assert jnp.allclose(cls_probs, ref_cls, atol=1e-5, rtol=1e-5)
    assert jnp.allclose(depth_map, ref_depth, atol=1e-5, rtol=1e-5)

    print("KERNEL_OK")
</pallas_src>

<mosaic_0001>
module attributes {stable_mosaic.version = 11 : i64} {
  func.func @_liveness_head_kernel(%arg0: i32, %arg1: memref<2x7x7x32xf32, #tpu.memory_space<vmem>>, %arg2: memref<3x3x32xf32, #tpu.memory_space<vmem>>, %arg3: memref<7x7x196xf32, #tpu.memory_space<vmem>>, %arg4: memref<2x1x2xf32, #tpu.memory_space<vmem>>, %arg5: memref<2x1x196xf32, #tpu.memory_space<vmem>>, %arg6: memref<2x1x2xf32, #tpu.memory_space<vmem>>, %arg7: memref<2x9x9x32xf32, #tpu.memory_space<vmem>>) attributes {dimension_semantics = [#tpu.dimension_semantics<parallel>], iteration_bounds = array<i64: 2>, scalar_prefetch = 0 : i64, scratch_operands = 1 : i64, tpu.core_type = #tpu.core_type<tc>, window_params = [{transform_indices = @transform_0, window_bounds = array<i64: 2, 7, 7, 32>}, {pipeline_mode = #tpu.pipeline_mode<synchronous>, transform_indices = @transform_1, window_bounds = array<i64: 3, 3, 32>}, {pipeline_mode = #tpu.pipeline_mode<synchronous>, transform_indices = @transform_2, window_bounds = array<i64: 7, 7, 196>}, {transform_indices = @transform_3, window_bounds = array<i64: 2, 1, 2>}, {transform_indices = @transform_4, window_bounds = array<i64: 2, 1, 196>}, {transform_indices = @transform_5, window_bounds = array<i64: 2, 1, 2>}]} {
    %cst = arith.constant 0.000000e+00 : f32
    %0 = vector.broadcast %cst : f32 to vector<2x1x9x32xf32>
    %cst_0 = arith.constant 0.000000e+00 : f32
    %1 = vector.broadcast %cst_0 : f32 to vector<2x9x1x32xf32>
    %c0 = arith.constant 0 : index
    %c0_1 = arith.constant 0 : index
    %c0_2 = arith.constant 0 : index
    %c0_3 = arith.constant 0 : index
    %2 = vector.load %arg7[%c0, %c0_1, %c0_2, %c0_3] : memref<2x9x9x32xf32, #tpu.memory_space<vmem>>, vector<2x1x9x32xf32>
    tpu.vector_store %arg7[%c0, %c0_1, %c0_2, %c0_3], %0 {strides = array<i32>} : memref<2x9x9x32xf32, #tpu.memory_space<vmem>>, vector<2x1x9x32xf32>,
    %c0_4 = arith.constant 0 : index
    %c8 = arith.constant 8 : index
    %c0_5 = arith.constant 0 : index
    %c0_6 = arith.constant 0 : index
    %3 = vector.load %arg7[%c0_4, %c8, %c0_5, %c0_6] : memref<2x9x9x32xf32, #tpu.memory_space<vmem>>, vector<2x1x9x32xf32>
    tpu.vector_store %arg7[%c0_4, %c8, %c0_5, %c0_6], %0 {strides = array<i32>} : memref<2x9x9x32xf32, #tpu.memory_space<vmem>>, vector<2x1x9x32xf32>,
    %c0_7 = arith.constant 0 : index
    %c0_8 = arith.constant 0 : index
    %c0_9 = arith.constant 0 : index
    %c0_10 = arith.constant 0 : index
    %4 = vector.load %arg7[%c0_7, %c0_8, %c0_9, %c0_10] : memref<2x9x9x32xf32, #tpu.memory_space<vmem>>, vector<2x9x1x32xf32>
    tpu.vector_store %arg7[%c0_7, %c0_8, %c0_9, %c0_10], %1 {strides = array<i32>} : memref<2x9x9x32xf32, #tpu.memory_space<vmem>>, vector<2x9x1x32xf32>,
    %c0_11 = arith.constant 0 : index
    %c0_12 = arith.constant 0 : index
    %c8_13 = arith.constant 8 : index
    %c0_14 = arith.constant 0 : index
    %5 = vector.load %arg7[%c0_11, %c0_12, %c8_13, %c0_14] : memref<2x9x9x32xf32, #tpu.memory_space<vmem>>, vector<2x9x1x32xf32>
    tpu.vector_store %arg7[%c0_11, %c0_12, %c8_13, %c0_14], %1 {strides = array<i32>} : memref<2x9x9x32xf32, #tpu.memory_space<vmem>>, vector<2x9x1x32xf32>,
    %c0_15 = arith.constant 0 : index
    %c0_16 = arith.constant 0 : index
    %c0_17 = arith.constant 0 : index
    %c0_18 = arith.constant 0 : index
    %6 = vector.load %arg1[%c0_15, %c0_16, %c0_17, %c0_18] : memref<2x7x7x32xf32, #tpu.memory_space<vmem>>, vector<2x7x7x32xf32>
    %c0_19 = arith.constant 0 : index
    %c1 = arith.constant 1 : index
    %c1_20 = arith.constant 1 : index
    %c0_21 = arith.constant 0 : index
    %7 = vector.load %arg7[%c0_19, %c1, %c1_20, %c0_21] : memref<2x9x9x32xf32, #tpu.memory_space<vmem>>, vector<2x7x7x32xf32>
    tpu.vector_store %arg7[%c0_19, %c1, %c1_20, %c0_21], %6 {strides = array<i32>} : memref<2x9x9x32xf32, #tpu.memory_space<vmem>>, vector<2x7x7x32xf32>,
    %c0_22 = arith.constant 0 : index
    %c0_23 = arith.constant 0 : index
    %c0_24 = arith.constant 0 : index
    %c0_25 = arith.constant 0 : index
    %8 = vector.load %arg7[%c0_22, %c0_23, %c0_24, %c0_25] : memref<2x9x9x32xf32, #tpu.memory_space<vmem>>, vector<2x9x9x32xf32>
    %c0_26 = arith.constant 0 : index
    %c0_27 = arith.constant 0 : index
    %c0_28 = arith.constant 0 : index
    %9 = vector.load %arg2[%c0_26, %c0_27, %c0_28] : memref<3x3x32xf32, #tpu.memory_space<vmem>>, vector<3x3x32xf32>
    %10 = vector.extract_strided_slice %8 {offsets = [0, 0, 0, 0], sizes = [2, 7, 7, 32], strides = [1, 1, 1, 1]} : vector<2x9x9x32xf32> to vector<2x7x7x32xf32>
    %11 = vector.extract_strided_slice %9 {offsets = [0, 0, 0], sizes = [1, 1, 32], strides = [1, 1, 1]} : vector<3x3x32xf32> to vector<1x1x32xf32>
    %12 = vector.shape_cast %11 : vector<1x1x32xf32> to vector<32xf32>
    %13 = vector.shape_cast %12 : vector<32xf32> to vector<1x1x1x32xf32>
    %14 = vector.broadcast %13 : vector<1x1x1x32xf32> to vector<2x7x7x32xf32>
    %15 = arith.mulf %10, %14 : vector<2x7x7x32xf32>
    %16 = vector.extract_strided_slice %8 {offsets = [0, 0, 1, 0], sizes = [2, 7, 7, 32], strides = [1, 1, 1, 1]} : vector<2x9x9x32xf32> to vector<2x7x7x32xf32>
    %17 = vector.extract_strided_slice %9 {offsets = [0, 1, 0], sizes = [1, 1, 32], strides = [1, 1, 1]} : vector<3x3x32xf32> to vector<1x1x32xf32>
    %18 = vector.shape_cast %17 : vector<1x1x32xf32> to vector<32xf32>
    %19 = vector.shape_cast %18 : vector<32xf32> to vector<1x1x1x32xf32>
    %20 = vector.broadcast %19 : vector<1x1x1x32xf32> to vector<2x7x7x32xf32>
    %21 = arith.mulf %16, %20 : vector<2x7x7x32xf32>
    %22 = arith.addf %15, %21 : vector<2x7x7x32xf32>
    %23 = vector.extract_strided_slice %8 {offsets = [0, 0, 2, 0], sizes = [2, 7, 7, 32], strides = [1, 1, 1, 1]} : vector<2x9x9x32xf32> to vector<2x7x7x32xf32>
    %24 = vector.extract_strided_slice %9 {offsets = [0, 2, 0], sizes = [1, 1, 32], strides = [1, 1, 1]} : vector<3x3x32xf32> to vector<1x1x32xf32>
    %25 = vector.shape_cast %24 : vector<1x1x32xf32> to vector<32xf32>
    %26 = vector.shape_cast %25 : vector<32xf32> to vector<1x1x1x32xf32>
    %27 = vector.broadcast %26 : vector<1x1x1x32xf32> to vector<2x7x7x32xf32>
    %28 = arith.mulf %23, %27 : vector<2x7x7x32xf32>
    %29 = arith.addf %22, %28 : vector<2x7x7x32xf32>
    %30 = vector.extract_strided_slice %8 {offsets = [0, 1, 0, 0], sizes = [2, 7, 7, 32], strides = [1, 1, 1, 1]} : vector<2x9x9x32xf32> to vector<2x7x7x32xf32>
    %31 = vector.extract_strided_slice %9 {offsets = [1, 0, 0], sizes = [1, 1, 32], strides = [1, 1, 1]} : vector<3x3x32xf32> to vector<1x1x32xf32>
    %32 = vector.shape_cast %31 : vector<1x1x32xf32> to vector<32xf32>
    %33 = vector.shape_cast %32 : vector<32xf32> to vector<1x1x1x32xf32>
    %34 = vector.broadcast %33 : vector<1x1x1x32xf32> to vector<2x7x7x32xf32>
    %35 = arith.mulf %30, %34 : vector<2x7x7x32xf32>
    %36 = arith.addf %29, %35 : vector<2x7x7x32xf32>
    %37 = vector.extract_strided_slice %8 {offsets = [0, 1, 1, 0], sizes = [2, 7, 7, 32], strides = [1, 1, 1, 1]} : vector<2x9x9x32xf32> to vector<2x7x7x32xf32>
    %38 = vector.extract_strided_slice %9 {offsets = [1, 1, 0], sizes = [1, 1, 32], strides = [1, 1, 1]} : vector<3x3x32xf32> to vector<1x1x32xf32>
    %39 = vector.shape_cast %38 : vector<1x1x32xf32> to vector<32xf32>
    %40 = vector.shape_cast %39 : vector<32xf32> to vector<1x1x1x32xf32>
    %41 = vector.broadcast %40 : vector<1x1x1x32xf32> to vector<2x7x7x32xf32>
    %42 = arith.mulf %37, %41 : vector<2x7x7x32xf32>
    %43 = arith.addf %36, %42 : vector<2x7x7x32xf32>
    %44 = vector.extract_strided_slice %8 {offsets = [0, 1, 2, 0], sizes = [2, 7, 7, 32], strides = [1, 1, 1, 1]} : vector<2x9x9x32xf32> to vector<2x7x7x32xf32>
    %45 = vector.extract_strided_slice %9 {offsets = [1, 2, 0], sizes = [1, 1, 32], strides = [1, 1, 1]} : vector<3x3x32xf32> to vector<1x1x32xf32>
    %46 = vector.shape_cast %45 : vector<1x1x32xf32> to vector<32xf32>
    %47 = vector.shape_cast %46 : vector<32xf32> to vector<1x1x1x32xf32>
    %48 = vector.broadcast %47 : vector<1x1x1x32xf32> to vector<2x7x7x32xf32>
    %49 = arith.mulf %44, %48 : vector<2x7x7x32xf32>
    %50 = arith.addf %43, %49 : vector<2x7x7x32xf32>
    %51 = vector.extract_strided_slice %8 {offsets = [0, 2, 0, 0], sizes = [2, 7, 7, 32], strides = [1, 1, 1, 1]} : vector<2x9x9x32xf32> to vector<2x7x7x32xf32>
    %52 = vector.extract_strided_slice %9 {offsets = [2, 0, 0], sizes = [1, 1, 32], strides = [1, 1, 1]} : vector<3x3x32xf32> to vector<1x1x32xf32>
    %53 = vector.shape_cast %52 : vector<1x1x32xf32> to vector<32xf32>
    %54 = vector.shape_cast %53 : vector<32xf32> to vector<1x1x1x32xf32>
    %55 = vector.broadcast %54 : vector<1x1x1x32xf32> to vector<2x7x7x32xf32>
    %56 = arith.mulf %51, %55 : vector<2x7x7x32xf32>
    %57 = arith.addf %50, %56 : vector<2x7x7x32xf32>
    %58 = vector.extract_strided_slice %8 {offsets = [0, 2, 1, 0], sizes = [2, 7, 7, 32], strides = [1, 1, 1, 1]} : vector<2x9x9x32xf32> to vector<2x7x7x32xf32>
    %59 = vector.extract_strided_slice %9 {offsets = [2, 1, 0], sizes = [1, 1, 32], strides = [1, 1, 1]} : vector<3x3x32xf32> to vector<1x1x32xf32>
    %60 = vector.shape_cast %59 : vector<1x1x32xf32> to vector<32xf32>
    %61 = vector.shape_cast %60 : vector<32xf32> to vector<1x1x1x32xf32>
    %62 = vector.broadcast %61 : vector<1x1x1x32xf32> to vector<2x7x7x32xf32>
    %63 = arith.mulf %58, %62 : vector<2x7x7x32xf32>
    %64 = arith.addf %57, %63 : vector<2x7x7x32xf32>
    %65 = vector.extract_strided_slice %8 {offsets = [0, 2, 2, 0], sizes = [2, 7, 7, 32], strides = [1, 1, 1, 1]} : vector<2x9x9x32xf32> to vector<2x7x7x32xf32>
    %66 = vector.extract_strided_slice %9 {offsets = [2, 2, 0], sizes = [1, 1, 32], strides = [1, 1, 1]} : vector<3x3x32xf32> to vector<1x1x32xf32>
    %67 = vector.shape_cast %66 : vector<1x1x32xf32> to vector<32xf32>
    %68 = vector.shape_cast %67 : vector<32xf32> to vector<1x1x1x32xf32>
    %69 = vector.broadcast %68 : vector<1x1x1x32xf32> to vector<2x7x7x32xf32>
    %70 = arith.mulf %65, %69 : vector<2x7x7x32xf32>
    %71 = arith.addf %64, %70 : vector<2x7x7x32xf32>
    %cst_29 = arith.constant dense<0.000000e+00> : vector<2x7x7xf32>
    %72 = vector.multi_reduction <add>, %71, %cst_29 [3] : vector<2x7x7x32xf32> to vector<2x7x7xf32>
    %73 = arith.negf %72 : vector<2x7x7xf32>
    %74 = math.exp %73 : vector<2x7x7xf32>
    %cst_30 = arith.constant 1.000000e+00 : f32
    %75 = vector.broadcast %cst_30 : f32 to vector<2x7x7xf32>
    %76 = arith.addf %75, %74 : vector<2x7x7xf32>
    %77 = arith.divf %75, %76 : vector<2x7x7xf32>
    %c0_31 = arith.constant 0 : index
    %c0_32 = arith.constant 0 : index
    %c0_33 = arith.constant 0 : index
    %78 = vector.load %arg3[%c0_31, %c0_32, %c0_33] : memref<7x7x196xf32, #tpu.memory_space<vmem>>, vector<7x7x196xf32>
    %79 = vector.extract_strided_slice %77 {offsets = [0, 0, 0], sizes = [1, 7, 7], strides = [1, 1, 1]} : vector<2x7x7xf32> to vector<1x7x7xf32>
    %80 = vector.shape_cast %79 : vector<1x7x7xf32> to vector<7x7xf32>
    %81 = vector.extract_strided_slice %80 {offsets = [0, 0], sizes = [1, 7], strides = [1, 1]} : vector<7x7xf32> to vector<1x7xf32>
    %82 = vector.extract_strided_slice %78 {offsets = [0, 0, 0], sizes = [1, 7, 196], strides = [1, 1, 1]} : vector<7x7x196xf32> to vector<1x7x196xf32>
    %83 = vector.shape_cast %82 : vector<1x7x196xf32> to vector<7x196xf32>
    %cst_34 = arith.constant dense<0.000000e+00> : vector<1x196xf32>
    %84 = tpu.matmul %81, %83, %cst_34 {dimension_numbers = #tpu.dot_dimension_numbers<[1], [0], [0], [1], [0, 0, 1, 1], [], []>} : vector<1x7xf32>, vector<7x196xf32>, vector<1x196xf32> -> vector<1x196xf32>
    %85 = vector.extract_strided_slice %80 {offsets = [1, 0], sizes = [1, 7], strides = [1, 1]} : vector<7x7xf32> to vector<1x7xf32>
    %86 = vector.extract_strided_slice %78 {offsets = [1, 0, 0], sizes = [1, 7, 196], strides = [1, 1, 1]} : vector<7x7x196xf32> to vector<1x7x196xf32>
    %87 = vector.shape_cast %86 : vector<1x7x196xf32> to vector<7x196xf32>
    %cst_35 = arith.constant dense<0.000000e+00> : vector<1x196xf32>
    %88 = tpu.matmul %85, %87, %cst_35 {dimension_numbers = #tpu.dot_dimension_numbers<[1], [0], [0], [1], [0, 0, 1, 1], [], []>} : vector<1x7xf32>, vector<7x196xf32>, vector<1x196xf32> -> vector<1x196xf32>
    %89 = arith.addf %84, %88 : vector<1x196xf32>
    %90 = vector.extract_strided_slice %80 {offsets = [2, 0], sizes = [1, 7], strides = [1, 1]} : vector<7x7xf32> to vector<1x7xf32>
    %91 = vector.extract_strided_slice %78 {offsets = [2, 0, 0], sizes = [1, 7, 196], strides = [1, 1, 1]} : vector<7x7x196xf32> to vector<1x7x196xf32>
    %92 = vector.shape_cast %91 : vector<1x7x196xf32> to vector<7x196xf32>
    %cst_36 = arith.constant dense<0.000000e+00> : vector<1x196xf32>
    %93 = tpu.matmul %90, %92, %cst_36 {dimension_numbers = #tpu.dot_dimension_numbers<[1], [0], [0], [1], [0, 0, 1, 1], [], []>} : vector<1x7xf32>, vector<7x196xf32>, vector<1x196xf32> -> vector<1x196xf32>
    %94 = arith.addf %89, %93 : vector<1x196xf32>
    %95 = vector.extract_strided_slice %80 {offsets = [3, 0], sizes = [1, 7], strides = [1, 1]} : vector<7x7xf32> to vector<1x7xf32>
    %96 = vector.extract_strided_slice %78 {offsets = [3, 0, 0], sizes = [1, 7, 196], strides = [1, 1, 1]} : vector<7x7x196xf32> to vector<1x7x196xf32>
    %97 = vector.shape_cast %96 : vector<1x7x196xf32> to vector<7x196xf32>
    %cst_37 = arith.constant dense<0.000000e+00> : vector<1x196xf32>
    %98 = tpu.matmul %95, %97, %cst_37 {dimension_numbers = #tpu.dot_dimension_numbers<[1], [0], [0], [1], [0, 0, 1, 1], [], []>} : vector<1x7xf32>, vector<7x196xf32>, vector<1x196xf32> -> vector<1x196xf32>
    %99 = arith.addf %94, %98 : vector<1x196xf32>
    %100 = vector.extract_strided_slice %80 {offsets = [4, 0], sizes = [1, 7], strides = [1, 1]} : vector<7x7xf32> to vector<1x7xf32>
    %101 = vector.extract_strided_slice %78 {offsets = [4, 0, 0], sizes = [1, 7, 196], strides = [1, 1, 1]} : vector<7x7x196xf32> to vector<1x7x196xf32>
    %102 = vector.shape_cast %101 : vector<1x7x196xf32> to vector<7x196xf32>
    %cst_38 = arith.constant dense<0.000000e+00> : vector<1x196xf32>
    %103 = tpu.matmul %100, %102, %cst_38 {dimension_numbers = #tpu.dot_dimension_numbers<[1], [0], [0], [1], [0, 0, 1, 1], [], []>} : vector<1x7xf32>, vector<7x196xf32>, vector<1x196xf32> -> vector<1x196xf32>
    %104 = arith.addf %99, %103 : vector<1x196xf32>
    %105 = vector.extract_strided_slice %80 {offsets = [5, 0], sizes = [1, 7], strides = [1, 1]} : vector<7x7xf32> to vector<1x7xf32>
    %106 = vector.extract_strided_slice %78 {offsets = [5, 0, 0], sizes = [1, 7, 196], strides = [1, 1, 1]} : vector<7x7x196xf32> to vector<1x7x196xf32>
    %107 = vector.shape_cast %106 : vector<1x7x196xf32> to vector<7x196xf32>
    %cst_39 = arith.constant dense<0.000000e+00> : vector<1x196xf32>
    %108 = tpu.matmul %105, %107, %cst_39 {dimension_numbers = #tpu.dot_dimension_numbers<[1], [0], [0], [1], [0, 0, 1, 1], [], []>} : vector<1x7xf32>, vector<7x196xf32>, vector<1x196xf32> -> vector<1x196xf32>
    %109 = arith.addf %104, %108 : vector<1x196xf32>
    %110 = vector.extract_strided_slice %80 {offsets = [6, 0], sizes = [1, 7], strides = [1, 1]} : vector<7x7xf32> to vector<1x7xf32>
    %111 = vector.extract_strided_slice %78 {offsets = [6, 0, 0], sizes = [1, 7, 196], strides = [1, 1, 1]} : vector<7x7x196xf32> to vector<1x7x196xf32>
    %112 = vector.shape_cast %111 : vector<1x7x196xf32> to vector<7x196xf32>
    %cst_40 = arith.constant dense<0.000000e+00> : vector<1x196xf32>
    %113 = tpu.matmul %110, %112, %cst_40 {dimension_numbers = #tpu.dot_dimension_numbers<[1], [0], [0], [1], [0, 0, 1, 1], [], []>} : vector<1x7xf32>, vector<7x196xf32>, vector<1x196xf32> -> vector<1x196xf32>
    %114 = arith.addf %109, %113 : vector<1x196xf32>
    %c0_41 = arith.constant 0 : index
    %c0_42 = arith.constant 0 : index
    %c0_43 = arith.constant 0 : index
    %115 = vector.load %arg5[%c0_41, %c0_42, %c0_43] : memref<2x1x196xf32, #tpu.memory_space<vmem>>, vector<1x1x196xf32>
    %116 = vector.shape_cast %115 : vector<1x1x196xf32> to vector<1x196xf32>
    %117 = vector.shape_cast %114 : vector<1x196xf32> to vector<1x1x196xf32>
    tpu.vector_store %arg5[%c0_41, %c0_42, %c0_43], %117 {strides = array<i32>} : memref<2x1x196xf32, #tpu.memory_space<vmem>>, vector<1x1x196xf32>,
    %118 = vector.extract_strided_slice %77 {offsets = [1, 0, 0], sizes = [1, 7, 7], strides = [1, 1, 1]} : vector<2x7x7xf32> to vector<1x7x7xf32>
    %119 = vector.shape_cast %118 : vector<1x7x7xf32> to vector<7x7xf32>
    %120 = vector.extract_strided_slice %119 {offsets = [0, 0], sizes = [1, 7], strides = [1, 1]} : vector<7x7xf32> to vector<1x7xf32>
    %121 = vector.extract_strided_slice %78 {offsets = [0, 0, 0], sizes = [1, 7, 196], strides = [1, 1, 1]} : vector<7x7x196xf32> to vector<1x7x196xf32>
    %122 = vector.shape_cast %121 : vector<1x7x196xf32> to vector<7x196xf32>
    %cst_44 = arith.constant dense<0.000000e+00> : vector<1x196xf32>
    %123 = tpu.matmul %120, %122, %cst_44 {dimension_numbers = #tpu.dot_dimension_numbers<[1], [0], [0], [1], [0, 0, 1, 1], [], []>} : vector<1x7xf32>, vector<7x196xf32>, vector<1x196xf32> -> vector<1x196xf32>
    %124 = vector.extract_strided_slice %119 {offsets = [1, 0], sizes = [1, 7], strides = [1, 1]} : vector<7x7xf32> to vector<1x7xf32>
    %125 = vector.extract_strided_slice %78 {offsets = [1, 0, 0], sizes = [1, 7, 196], strides = [1, 1, 1]} : vector<7x7x196xf32> to vector<1x7x196xf32>
    %126 = vector.shape_cast %125 : vector<1x7x196xf32> to vector<7x196xf32>
    %cst_45 = arith.constant dense<0.000000e+00> : vector<1x196xf32>
    %127 = tpu.matmul %124, %126, %cst_45 {dimension_numbers = #tpu.dot_dimension_numbers<[1], [0], [0], [1], [0, 0, 1, 1], [], []>} : vector<1x7xf32>, vector<7x196xf32>, vector<1x196xf32> -> vector<1x196xf32>
    %128 = arith.addf %123, %127 : vector<1x196xf32>
    %129 = vector.extract_strided_slice %119 {offsets = [2, 0], sizes = [1, 7], strides = [1, 1]} : vector<7x7xf32> to vector<1x7xf32>
    %130 = vector.extract_strided_slice %78 {offsets = [2, 0, 0], sizes = [1, 7, 196], strides = [1, 1, 1]} : vector<7x7x196xf32> to vector<1x7x196xf32>
    %131 = vector.shape_cast %130 : vector<1x7x196xf32> to vector<7x196xf32>
    %cst_46 = arith.constant dense<0.000000e+00> : vector<1x196xf32>
    %132 = tpu.matmul %129, %131, %cst_46 {dimension_numbers = #tpu.dot_dimension_numbers<[1], [0], [0], [1], [0, 0, 1, 1], [], []>} : vector<1x7xf32>, vector<7x196xf32>, vector<1x196xf32> -> vector<1x196xf32>
    %133 = arith.addf %128, %132 : vector<1x196xf32>
    %134 = vector.extract_strided_slice %119 {offsets = [3, 0], sizes = [1, 7], strides = [1, 1]} : vector<7x7xf32> to vector<1x7xf32>
    %135 = vector.extract_strided_slice %78 {offsets = [3, 0, 0], sizes = [1, 7, 196], strides = [1, 1, 1]} : vector<7x7x196xf32> to vector<1x7x196xf32>
    %136 = vector.shape_cast %135 : vector<1x7x196xf32> to vector<7x196xf32>
    %cst_47 = arith.constant dense<0.000000e+00> : vector<1x196xf32>
    %137 = tpu.matmul %134, %136, %cst_47 {dimension_numbers = #tpu.dot_dimension_numbers<[1], [0], [0], [1], [0, 0, 1, 1], [], []>} : vector<1x7xf32>, vector<7x196xf32>, vector<1x196xf32> -> vector<1x196xf32>
    %138 = arith.addf %133, %137 : vector<1x196xf32>
    %139 = vector.extract_strided_slice %119 {offsets = [4, 0], sizes = [1, 7], strides = [1, 1]} : vector<7x7xf32> to vector<1x7xf32>
    %140 = vector.extract_strided_slice %78 {offsets = [4, 0, 0], sizes = [1, 7, 196], strides = [1, 1, 1]} : vector<7x7x196xf32> to vector<1x7x196xf32>
    %141 = vector.shape_cast %140 : vector<1x7x196xf32> to vector<7x196xf32>
    %cst_48 = arith.constant dense<0.000000e+00> : vector<1x196xf32>
    %142 = tpu.matmul %139, %141, %cst_48 {dimension_numbers = #tpu.dot_dimension_numbers<[1], [0], [0], [1], [0, 0, 1, 1], [], []>} : vector<1x7xf32>, vector<7x196xf32>, vector<1x196xf32> -> vector<1x196xf32>
    %143 = arith.addf %138, %142 : vector<1x196xf32>
    %144 = vector.extract_strided_slice %119 {offsets = [5, 0], sizes = [1, 7], strides = [1, 1]} : vector<7x7xf32> to vector<1x7xf32>
    %145 = vector.extract_strided_slice %78 {offsets = [5, 0, 0], sizes = [1, 7, 196], strides = [1, 1, 1]} : vector<7x7x196xf32> to vector<1x7x196xf32>
    %146 = vector.shape_cast %145 : vector<1x7x196xf32> to vector<7x196xf32>
    %cst_49 = arith.constant dense<0.000000e+00> : vector<1x196xf32>
    %147 = tpu.matmul %144, %146, %cst_49 {dimension_numbers = #tpu.dot_dimension_numbers<[1], [0], [0], [1], [0, 0, 1, 1], [], []>} : vector<1x7xf32>, vector<7x196xf32>, vector<1x196xf32> -> vector<1x196xf32>
    %148 = arith.addf %143, %147 : vector<1x196xf32>
    %149 = vector.extract_strided_slice %119 {offsets = [6, 0], sizes = [1, 7], strides = [1, 1]} : vector<7x7xf32> to vector<1x7xf32>
    %150 = vector.extract_strided_slice %78 {offsets = [6, 0, 0], sizes = [1, 7, 196], strides = [1, 1, 1]} : vector<7x7x196xf32> to vector<1x7x196xf32>
    %151 = vector.shape_cast %150 : vector<1x7x196xf32> to vector<7x196xf32>
    %cst_50 = arith.constant dense<0.000000e+00> : vector<1x196xf32>
    %152 = tpu.matmul %149, %151, %cst_50 {dimension_numbers = #tpu.dot_dimension_numbers<[1], [0], [0], [1], [0, 0, 1, 1], [], []>} : vector<1x7xf32>, vector<7x196xf32>, vector<1x196xf32> -> vector<1x196xf32>
    %153 = arith.addf %148, %152 : vector<1x196xf32>
    %c1_51 = arith.constant 1 : index
    %c0_52 = arith.constant 0 : index
    %c0_53 = arith.constant 0 : index
    %154 = vector.load %arg5[%c1_51, %c0_52, %c0_53] : memref<2x1x196xf32, #tpu.memory_space<vmem>>, vector<1x1x196xf32>
    %155 = vector.shape_cast %154 : vector<1x1x196xf32> to vector<1x196xf32>
    %156 = vector.shape_cast %153 : vector<1x196xf32> to vector<1x1x196xf32>
    tpu.vector_store %arg5[%c1_51, %c0_52, %c0_53], %156 {strides = array<i32>} : memref<2x1x196xf32, #tpu.memory_space<vmem>>, vector<1x1x196xf32>,
    %c0_54 = arith.constant 0 : index
    %c0_55 = arith.constant 0 : index
    %c0_56 = arith.constant 0 : index
    %157 = vector.load %arg4[%c0_54, %c0_55, %c0_56] : memref<2x1x2xf32, #tpu.memory_space<vmem>>, vector<2x1x2xf32>
    %cst_57 = arith.constant dense<0xFF800000> : vector<2x1xf32>
    %158 = vector.multi_reduction <maximumf>, %157, %cst_57 [2] : vector<2x1x2xf32> to vector<2x1xf32>
    %159 = vector.shape_cast %158 : vector<2x1xf32> to vector<2x1x1xf32>
    %160 = vector.broadcast %159 : vector<2x1x1xf32> to vector<2x1x2xf32>
    %161 = arith.subf %157, %160 : vector<2x1x2xf32>
    %162 = math.exp %161 : vector<2x1x2xf32>
    %cst_58 = arith.constant dense<0.000000e+00> : vector<2x1xf32>
    %163 = vector.multi_reduction <add>, %162, %cst_58 [2] : vector<2x1x2xf32> to vector<2x1xf32>
    %164 = vector.shape_cast %163 : vector<2x1xf32> to vector<2x1x1xf32>
    %165 = tpu.reciprocal %164 : vector<2x1x1xf32> -> vector<2x1x1xf32>
    %166 = vector.broadcast %165 : vector<2x1x1xf32> to vector<2x1x2xf32>
    %167 = arith.mulf %162, %166 : vector<2x1x2xf32>
    %c0_59 = arith.constant 0 : index
    %c0_60 = arith.constant 0 : index
    %c0_61 = arith.constant 0 : index
    %168 = vector.load %arg6[%c0_59, %c0_60, %c0_61] : memref<2x1x2xf32, #tpu.memory_space<vmem>>, vector<2x1x2xf32>
    tpu.vector_store %arg6[%c0_59, %c0_60, %c0_61], %167 {strides = array<i32>} : memref<2x1x2xf32, #tpu.memory_space<vmem>>, vector<2x1x2xf32>,
    return
  }
  func.func @transform_0(%arg0: i32) -> (i32, i32, i32, i32) {
    %c0_i32 = arith.constant 0 : i32
    %c0_i32_0 = arith.constant 0 : i32
    %c0_i32_1 = arith.constant 0 : i32
    %c0_i32_2 = arith.constant 0 : i32
    return %arg0, %c0_i32, %c0_i32_0, %c0_i32_1 : i32, i32, i32, i32
  }
  func.func @transform_1(%arg0: i32) -> (i32, i32, i32) {
    %c0_i32 = arith.constant 0 : i32
    %c0_i32_0 = arith.constant 0 : i32
    %c0_i32_1 = arith.constant 0 : i32
    %c0_i32_2 = arith.constant 0 : i32
    return %c0_i32, %c0_i32_0, %c0_i32_1 : i32, i32, i32
  }
  func.func @transform_2(%arg0: i32) -> (i32, i32, i32) {
    %c0_i32 = arith.constant 0 : i32
    %c0_i32_0 = arith.constant 0 : i32
    %c0_i32_1 = arith.constant 0 : i32
    %c0_i32_2 = arith.constant 0 : i32
    return %c0_i32, %c0_i32_0, %c0_i32_1 : i32, i32, i32
  }
  func.func @transform_3(%arg0: i32) -> (i32, i32, i32) {
    %c0_i32 = arith.constant 0 : i32
    %c0_i32_0 = arith.constant 0 : i32
    %c0_i32_1 = arith.constant 0 : i32
    return %arg0, %c0_i32, %c0_i32_0 : i32, i32, i32
  }
  func.func @transform_4(%arg0: i32) -> (i32, i32, i32) {
    %c0_i32 = arith.constant 0 : i32
    %c0_i32_0 = arith.constant 0 : i32
    %c0_i32_1 = arith.constant 0 : i32
    return %arg0, %c0_i32, %c0_i32_0 : i32, i32, i32
  }
  func.func @transform_5(%arg0: i32) -> (i32, i32, i32) {
    %c0_i32 = arith.constant 0 : i32
    %c0_i32_0 = arith.constant 0 : i32
    %c0_i32_1 = arith.constant 0 : i32
    return %arg0, %c0_i32, %c0_i32_0 : i32, i32, i32
  }
}

</mosaic_0001>

<llo_original>
// kernel: tpu_custom_call.1
$region0: #{tpu_custom_call.1}
  #allocation0 [shape = 'u32[]', space=smem, size = 0x4, offset = 0x4, fixed_abs, tag = 'smem constant byte address 0x4 - core index']
  #allocation1 [shape = 'u32[72,128]{1,0:T(1,128)}', space=vmem, size = 0x9000, scoped, tag = 'internal scratch']
  #allocation2 [shape = 'f32[2,9,9,32]{3,2,1,0:T(8,128)}', space=vmem, size = 0x24000, scoped, tag = 'scratch operand']
  %s0 = inlined_call_operand.vmem [shape: f32[4,7,7,32], index: 0, kind: input, shape index: {}]
  %s1 = inlined_call_operand.vmem [shape: f32[3,3,32], index: 1, kind: input, shape index: {}]
  %s2 = inlined_call_operand.vmem [shape: f32[7,7,196], index: 2, kind: input, shape index: {}]
  %s3 = inlined_call_operand.vmem [shape: f32[4,1,2], index: 3, kind: input, shape index: {}]
  %s4 = inlined_call_operand.hbm [shape: f32[4,1,196], index: 4, kind: output, shape index: {0}]
  %s5 = inlined_call_operand.vmem [shape: f32[4,1,2], index: 5, kind: output, shape index: {1}]
  %6 = xla_tuple %s4, %s5
  %s7 = sld [smem:[#allocation0]]
  $region57: #{tpu_custom_call.1} parent=0
    _
  %s9 = ssub.s32 1, %s7
  %s10 = scalar_select 0, %s9, %s7
  $region1: #{tpu_custom_call.1} parent=0
    #allocation3 [shape = 'u8[4096]{0}', space=vmem, size = 0x1000, scoped, tag = 'output window, operand 0']
    #allocation4 [shape = 's32[2]{0}', space=sflag, size = 0x8, scoped, tag = 'scoped memory for tpu_custom_call.1']
    %11 = vsyncpa [#allocation4], 0
    %s12 = scalar_lea.sflag [#allocation4], 1
    %13 = vsyncpa %s12, 0
    loop: start=0, step=1, limit=4
    $region2: #{tpu_custom_call.1} parent=1 // loop_pre_header
      _
    $region3: #{tpu_custom_call.1} parent=1 // loop_header
      %s15 = sphi 0, %s19
      %p16 = scmp.ge.s32.totalorder %s15, 4
      %s25 = sphi 0, %s27
      %s28 = sphi 0, %s25
      %s29 = sphi 0, %s28
      %s45 = sphi 0, %s29
      %s49 = sphi 0, %s49
      %s51 = sphi 0, %s49
      %s52 = sphi 0, %s51
      %s66 = sphi 0, %s52
      %s70 = sphi 0, %s70
      %s72 = sphi 0, %s70
      %s73 = sphi 0, %s72
      %s87 = sphi 0, %s73
      %s93 = sphi 0, %s95
      %s96 = sphi 0, %s93
      %s97 = sphi 0, %s96
      %s113 = sphi 0, %s97
      %s119 = sphi 0, %s121
      %s122 = sphi 0, %s119
      %s123 = sphi 0, %s122
      %s139 = sphi 0, %s123
      %s145 = sphi 0, %s147
      %s148 = sphi 0, %s145
      %s149 = sphi 0, %s148
      %s165 = sphi 0, %s149
    $region4: #{tpu_custom_call.1} parent=1 // loop_header_branch
      %18 = sbr.rel (%p16) target = $region8
    $region5: #{tpu_custom_call.1} parent=1 // loop_body
      %s20 = ssub.s32 %s15, 1
      %s21 = ssub.s32 %s15, 2
      %s22 = sadd.s32 %s15, 1
      %s23 = ssub.s32 %s15, %s22
      %p24 = scmp.eq.s32.totalorder %s23, 0
      %s26 = sadd.s32 %s25, 1
      %s27 = scalar_select %p24, %s25, %s26
      %p30 = pneg %p24
      %p31 = scmp.eq.s32.totalorder %s15, 1
      %p32 = por %p30, %p31
      %p33 = scmp.ne.s32.totalorder %s25, %s28
      %p34 = scmp.eq.s32.totalorder %s15, 0
      %p35 = por %p33, %p34
      %p36 = scmp.ne.s32.totalorder %s25, %s28
      %p37 = scmp.eq.s32.totalorder %s20, 1
      %p38 = por %p36, %p37
      %p39 = scmp.ne.s32.totalorder %s28, %s29
      %p40 = scmp.eq.s32.totalorder %s20, 0
      %p41 = por %p39, %p40
      %p42 = scmp.ne.s32.totalorder %s28, %s29
      %p43 = scmp.eq.s32.totalorder %s21, 1
      %p44 = por %p42, %p43
      %p46 = scmp.ne.s32.totalorder %s29, %s45
      %p47 = scmp.eq.s32.totalorder %s21, 0
      %p48 = por %p46, %p47
      %s50 = sadd.s32 %s49, 1
      %p53 = scmp.eq.s32.totalorder %s15, 1
      %p54 = scmp.ne.s32.totalorder %s49, %s51
      %p55 = scmp.eq.s32.totalorder %s15, 0
      %p56 = por %p54, %p55
      %p57 = scmp.ne.s32.totalorder %s49, %s51
      %p58 = scmp.eq.s32.totalorder %s20, 1
      %p59 = por %p57, %p58
      %p60 = scmp.ne.s32.totalorder %s51, %s52
      %p61 = scmp.eq.s32.totalorder %s20, 0
      %p62 = por %p60, %p61
      %p63 = scmp.ne.s32.totalorder %s51, %s52
      %p64 = scmp.eq.s32.totalorder %s21, 1
      %p65 = por %p63, %p64
      %p67 = scmp.ne.s32.totalorder %s52, %s66
      %p68 = scmp.eq.s32.totalorder %s21, 0
      %p69 = por %p67, %p68
      %s71 = sadd.s32 %s70, 1
      %p74 = scmp.eq.s32.totalorder %s15, 1
      %p75 = scmp.ne.s32.totalorder %s70, %s72
      %p76 = scmp.eq.s32.totalorder %s15, 0
      %p77 = por %p75, %p76
      %p78 = scmp.ne.s32.totalorder %s70, %s72
      %p79 = scmp.eq.s32.totalorder %s20, 1
      %p80 = por %p78, %p79
      %p81 = scmp.ne.s32.totalorder %s72, %s73
      %p82 = scmp.eq.s32.totalorder %s20, 0
      %p83 = por %p81, %p82
      %p84 = scmp.ne.s32.totalorder %s72, %s73
      %p85 = scmp.eq.s32.totalorder %s21, 1
      %p86 = por %p84, %p85
      %p88 = scmp.ne.s32.totalorder %s73, %s87
      %p89 = scmp.eq.s32.totalorder %s21, 0
      %p90 = por %p88, %p89
      %s91 = ssub.s32 %s15, %s22
      %p92 = scmp.eq.s32.totalorder %s91, 0
      %s94 = sadd.s32 %s93, 1
      %s95 = scalar_select %p92, %s93, %s94
      %p98 = pneg %p92
      %p99 = scmp.eq.s32.totalorder %s15, 1
      %p100 = por %p98, %p99
      %p101 = scmp.ne.s32.totalorder %s93, %s96
      %p102 = scmp.eq.s32.totalorder %s15, 0
      %p103 = por %p101, %p102
      %p104 = scmp.ne.s32.totalorder %s93, %s96
      %p105 = scmp.eq.s32.totalorder %s20, 1
      %p106 = por %p104, %p105
      %p107 = scmp.ne.s32.totalorder %s96, %s97
      %p108 = scmp.eq.s32.totalorder %s20, 0
      %p109 = por %p107, %p108
      %p110 = scmp.ne.s32.totalorder %s96, %s97
      %p111 = scmp.eq.s32.totalorder %s21, 1
      %p112 = por %p110, %p111
      %p114 = scmp.ne.s32.totalorder %s97, %s113
      %p115 = scmp.eq.s32.totalorder %s21, 0
      %p116 = por %p114, %p115
      %s117 = ssub.s32 %s15, %s22
      %p118 = scmp.eq.s32.totalorder %s117, 0
      %s120 = sadd.s32 %s119, 1
      %s121 = scalar_select %p118, %s119, %s120
      %p124 = pneg %p118
      %p125 = scmp.eq.s32.totalorder %s15, 1
      %p126 = por %p124, %p125
      %p127 = scmp.ne.s32.totalorder %s119, %s122
      %p128 = scmp.eq.s32.totalorder %s15, 0
      %p129 = por %p127, %p128
      %p130 = scmp.ne.s32.totalorder %s119, %s122
      %p131 = scmp.eq.s32.totalorder %s20, 1
      %p132 = por %p130, %p131
      %p133 = scmp.ne.s32.totalorder %s122, %s123
      %p134 = scmp.eq.s32.totalorder %s20, 0
      %p135 = por %p133, %p134
      %p136 = scmp.ne.s32.totalorder %s122, %s123
      %p137 = scmp.eq.s32.totalorder %s21, 1
      %p138 = por %p136, %p137
      %p140 = scmp.ne.s32.totalorder %s123, %s139
      %p141 = scmp.eq.s32.totalorder %s21, 0
      %p142 = por %p140, %p141
      %s143 = ssub.s32 %s15, %s22
      %p144 = scmp.eq.s32.totalorder %s143, 0
      %s146 = sadd.s32 %s145, 1
      %s147 = scalar_select %p144, %s145, %s146
      %p150 = pneg %p144
      %p151 = scmp.eq.s32.totalorder %s15, 1
      %p152 = por %p150, %p151
      %p153 = scmp.ne.s32.totalorder %s145, %s148
      %p154 = scmp.eq.s32.totalorder %s15, 0
      %p155 = por %p153, %p154
      %p156 = scmp.ne.s32.totalorder %s145, %s148
      %p157 = scmp.eq.s32.totalorder %s20, 1
      %p158 = por %p156, %p157
      %p159 = scmp.ne.s32.totalorder %s148, %s149
      %p160 = scmp.eq.s32.totalorder %s20, 0
      %p161 = por %p159, %p160
      %p162 = scmp.ne.s32.totalorder %s148, %s149
      %p163 = scmp.eq.s32.totalorder %s21, 1
      %p164 = por %p162, %p163
      %p166 = scmp.ne.s32.totalorder %s149, %s165
      %p167 = scmp.eq.s32.totalorder %s21, 0
      %p168 = por %p166, %p167
      %p169 = scmp.le.s32.totalorder 1, %s15
      %p170 = scmp.lt.s32.totalorder %s15, 3
      %p171 = pnand %p169, %p170
      %p172 = pneg %p171
      // Predicated region
      $region9: #{tpu_custom_call.1} parent=5 // pred_check
        _
      $region10: #{tpu_custom_call.1} parent=5 // pred_check_branch
        %174 = sbr.rel (%p171) target = $region12
      $region11: #{tpu_custom_call.1} parent=5 // pred_region
        %s175 = ssub.s32 %s15, 1
        // Predicated region
        $region13: #{tpu_custom_call.1} parent=11 // pred_check
          %p176 = pneg %p62
        $region14: #{tpu_custom_call.1} parent=11 // pred_check_branch
          %178 = sbr.rel (%p176) target = $region16
        $region15: #{tpu_custom_call.1} parent=11 // pred_region
          _
        $region16: #{tpu_custom_call.1} parent=11 // pred_fallthru
          _
        // Predicated region
        $region17: #{tpu_custom_call.1} parent=11 // pred_check
          %p179 = pneg %p83
        $region18: #{tpu_custom_call.1} parent=11 // pred_check_branch
          %181 = sbr.rel (%p179) target = $region20
        $region19: #{tpu_custom_call.1} parent=11 // pred_region
          _
        $region20: #{tpu_custom_call.1} parent=11 // pred_fallthru
          _
      $region12: #{tpu_custom_call.1} parent=5 // pred_fallthru
        _
      %p182 = scmp.lt.s32.totalorder %s15, 2
      // Predicated region
      $region21: #{tpu_custom_call.1} parent=5 // pred_check
        %p183 = pneg %p182
      $region22: #{tpu_custom_call.1} parent=5 // pred_check_branch
        %185 = sbr.rel (%p183) target = $region24
      $region23: #{tpu_custom_call.1} parent=5 // pred_region
        // Predicated region
        $region25: #{tpu_custom_call.1} parent=23 // pred_check
          %p186 = pneg %p35
        $region26: #{tpu_custom_call.1} parent=23 // pred_check_branch
          %188 = sbr.rel (%p186) target = $region28
        $region27: #{tpu_custom_call.1} parent=23 // pred_region
          %s189 = smul.u32 2, %s15
          %p190 = scmp.lt.s32.totalorder %s189, 3
          %s191 = scalar_select %p190, %s189, 3
          %s192 = smul.addr %s191, 7
          %s193 = smul.addr %s192, 8
          %s194 = scalar_lea.vmem %s0, %s193
          %s195 = smul.u32 2, %s15
        $region28: #{tpu_custom_call.1} parent=23 // pred_fallthru
          _
        // Predicated region
        $region29: #{tpu_custom_call.1} parent=23 // pred_check
          %p196 = pneg %p103
        $region30: #{tpu_custom_call.1} parent=23 // pred_check_branch
          %198 = sbr.rel (%p196) target = $region32
        $region31: #{tpu_custom_call.1} parent=23 // pred_region
          %s199 = smul.u32 2, %s15
          %p200 = scmp.lt.s32.totalorder %s199, 3
          %s201 = scalar_select %p200, %s199, 3
          %s202 = scalar_lea.vmem %s3, %s201
          %s203 = smul.u32 2, %s15
        $region32: #{tpu_custom_call.1} parent=23 // pred_fallthru
          _
      $region24: #{tpu_custom_call.1} parent=5 // pred_fallthru
        _
      %p204 = scmp.le.s32.totalorder 1, %s15
      %p205 = scmp.lt.s32.totalorder %s15, 3
      %p206 = pnand %p204, %p205
      %p207 = pneg %p206
      // Predicated region
      $region33: #{tpu_custom_call.1} parent=5 // pred_check
        _
      $region34: #{tpu_custom_call.1} parent=5 // pred_check_branch
        %209 = sbr.rel (%p206) target = $region36
      $region35: #{tpu_custom_call.1} parent=5 // pred_region
        %s210 = ssub.s32 %s15, 1
        %s211 = smul.u32 2, %s20
        %p212 = scmp.lt.s32.totalorder %s211, 3
        %s213 = scalar_select %p212, %s211, 3
        %s214 = smul.addr %s213, 7
        %s215 = smul.addr %s214, 8
        %s216 = scalar_lea.vmem %s0, %s215
        %p217 = pneg %p41
        %p218 = pneg %p38
        %p219 = pneg %p62
        %p220 = pneg %p59
        %p221 = pneg %p83
        %p222 = pneg %p80
        %s223 = smul.u32 2, %s20
        %p224 = scmp.lt.s32.totalorder %s223, 3
        %s225 = scalar_select %p224, %s223, 3
        %s226 = scalar_lea.vmem %s3, %s225
        %p227 = pneg %p109
        %p228 = pneg %p106
        %p229 = pneg %p135
        %p230 = pneg %p132
        %s231 = sand.u32 %s122, 1
        %s232 = scalar_lea.sflag [#allocation4], %s231
        %s233 = sand.u32 %s122, 1
        %s234 = smul.addr %s233, 4
        %s235 = scalar_lea.vmem [#allocation3], %s234
        %p236 = pneg %p161
        %p237 = pneg %p158
        %s238 = smul.u32 2, %s20
        %p239 = scmp.lt.s32.totalorder %s238, 3
        %s240 = scalar_select %p239, %s238, 3
        %s241 = scalar_lea.vmem %s5, %s240
        %s242 = smul.u32 2, %s20
        %p243 = scmp.lt.s32.totalorder %s242, 3
        %s244 = scalar_select %p243, %s242, 3
        %s245 = smul.addr %s244, 7
        %s246 = smul.addr %s245, 8
        %s247 = scalar_lea.vmem %s0, %s246
        %s248 = smul.u32 2, %s20
        %s249 = smul.u32 2, %s20
        %p250 = scmp.lt.s32.totalorder %s249, 3
        %s251 = scalar_select %p250, %s249, 3
        %s252 = scalar_lea.vmem %s3, %s251
        %s253 = smul.u32 2, %s20
        %s254 = smul.u32 2, %s20
        %s255 = smul.u32 2, %s20
        %p256 = scmp.lt.s32.totalorder %s255, 3
        %s257 = scalar_select %p256, %s255, 3
        %s258 = scalar_lea.vmem %s5, %s257
        %s259 = smul.u32 2, %s20
        %vm260 = vcmask 261120
        %261 = vst.msk [vmem:[#allocation2] sm:$0xff] %vm260, 0.0
        %vm262 = vcmask 253952
        %263 = vst.msk [vmem:[#allocation2 + $0x8] sm:$0x1] %vm262, 0.0
        %264 = vst.msk [vmem:[#allocation2 + $0x90] sm:$0xff] %vm260, 0.0
        %265 = vst.msk [vmem:[#allocation2 + $0x98] sm:$0x1] %vm262, 0.0
        %s266 = scalar_lea.vmem [#allocation2], 128
        %267 = vst.msk [vmem:[%s266] sm:$0xff] %vm260, 0.0
        %268 = vst.msk [vmem:[%s266 + $0x8] sm:$0x1] %vm262, 0.0
        %269 = vst.msk [vmem:[%s266 + $0x90] sm:$0xff] %vm260, 0.0
        %270 = vst.msk [vmem:[%s266 + $0x98] sm:$0x1] %vm262, 0.0
        %271 = vst.msk [vmem:[#allocation2] sm:$0x1] %vm262, 0.0
        %272 = vst.msk [vmem:[#allocation2 + $0x10] sm:$0x1] %vm262, 0.0
        %273 = vst.msk [vmem:[#allocation2 + $0x20] sm:$0x1] %vm262, 0.0
        %274 = vst.msk [vmem:[#allocation2 + $0x30] sm:$0x1] %vm262, 0.0
        %275 = vst.msk [vmem:[#allocation2 + $0x40] sm:$0x1] %vm262, 0.0
        %276 = vst.msk [vmem:[#allocation2 + $0x50] sm:$0x1] %vm262, 0.0
        %277 = vst.msk [vmem:[#allocation2 + $0x60] sm:$0x1] %vm262, 0.0
        %278 = vst.msk [vmem:[#allocation2 + $0x70] sm:$0x1] %vm262, 0.0
        %279 = vst.msk [vmem:[#allocation2 + $0x80] sm:$0x1] %vm262, 0.0
        %280 = vst.msk [vmem:[#allocation2 + $0x90] sm:$0x1] %vm262, 0.0
        %281 = vst.msk [vmem:[#allocation2 + $0xa0] sm:$0x1] %vm262, 0.0
        %282 = vst.msk [vmem:[#allocation2 + $0xb0] sm:$0x1] %vm262, 0.0
        %283 = vst.msk [vmem:[#allocation2 + $0xc0] sm:$0x1] %vm262, 0.0
        %284 = vst.msk [vmem:[#allocation2 + $0xd0] sm:$0x1] %vm262, 0.0
        %285 = vst.msk [vmem:[#allocation2 + $0xe0] sm:$0x1] %vm262, 0.0
        %286 = vst.msk [vmem:[#allocation2 + $0xf0] sm:$0x1] %vm262, 0.0
        %287 = vst.msk [vmem:[#allocation2 + $0x100] sm:$0x1] %vm262, 0.0
        %288 = vst.msk [vmem:[#allocation2 + $0x110] sm:$0x1] %vm262, 0.0
        %289 = vst.msk [vmem:[#allocation2 + $0x8] sm:$0x1] %vm262, 0.0
        %290 = vst.msk [vmem:[#allocation2 + $0x18] sm:$0x1] %vm262, 0.0
        %291 = vst.msk [vmem:[#allocation2 + $0x28] sm:$0x1] %vm262, 0.0
        %292 = vst.msk [vmem:[#allocation2 + $0x38] sm:$0x1] %vm262, 0.0
        %293 = vst.msk [vmem:[#allocation2 + $0x48] sm:$0x1] %vm262, 0.0
        %294 = vst.msk [vmem:[#allocation2 + $0x58] sm:$0x1] %vm262, 0.0
        %295 = vst.msk [vmem:[#allocation2 + $0x68] sm:$0x1] %vm262, 0.0
        %296 = vst.msk [vmem:[#allocation2 + $0x78] sm:$0x1] %vm262, 0.0
        %297 = vst.msk [vmem:[#allocation2 + $0x88] sm:$0x1] %vm262, 0.0
        %298 = vst.msk [vmem:[#allocation2 + $0x98] sm:$0x1] %vm262, 0.0
        %299 = vst.msk [vmem:[#allocation2 + $0xa8] sm:$0x1] %vm262, 0.0
        %300 = vst.msk [vmem:[#allocation2 + $0xb8] sm:$0x1] %vm262, 0.0
        %301 = vst.msk [vmem:[#allocation2 + $0xc8] sm:$0x1] %vm262, 0.0
        %302 = vst.msk [vmem:[#allocation2 + $0xd8] sm:$0x1] %vm262, 0.0
        %303 = vst.msk [vmem:[#allocation2 + $0xe8] sm:$0x1] %vm262, 0.0
        %304 = vst.msk [vmem:[#allocation2 + $0xf8] sm:$0x1] %vm262, 0.0
        %305 = vst.msk [vmem:[#allocation2 + $0x108] sm:$0x1] %vm262, 0.0
        %306 = vst.msk [vmem:[#allocation2 + $0x118] sm:$0x1] %vm262, 0.0
        %v307 = vld [vmem:[%s247] sm:$0x7f]
        %v308 = vld [vmem:[%s247 + $0x8] sm:$0x7f]
        %v309 = vld [vmem:[%s247 + $0x10] sm:$0x7f]
        %v310 = vld [vmem:[%s247 + $0x18] sm:$0x7f]
        %v311 = vld [vmem:[%s247 + $0x20] sm:$0x7f]
        %v312 = vld [vmem:[%s247 + $0x28] sm:$0x7f]
        %v313 = vld [vmem:[%s247 + $0x30] sm:$0x7f]
        %v314 = vld [vmem:[%s247 + $0x38] sm:$0x7f]
        %v315 = vld [vmem:[%s247 + $0x40] sm:$0x7f]
        %v316 = vld [vmem:[%s247 + $0x48] sm:$0x7f]
        %v317 = vld [vmem:[%s247 + $0x50] sm:$0x7f]
        %v318 = vld [vmem:[%s247 + $0x58] sm:$0x7f]
        %v319 = vld [vmem:[%s247 + $0x60] sm:$0x7f]
        %v320 = vld [vmem:[%s247 + $0x68] sm:$0x7f]
        %s321 = scalar_lea.vmem [#allocation2], 16
        %vm322 = vcmask 260096
        %323 = vst.msk [vmem:[%s321 + $0x1] sm:$0x7f] %vm322, %v307
        %324 = vst.msk [vmem:[%s321 + $0x11] sm:$0x7f] %vm322, %v308
        %325 = vst.msk [vmem:[%s321 + $0x21] sm:$0x7f] %vm322, %v309
        %326 = vst.msk [vmem:[%s321 + $0x31] sm:$0x7f] %vm322, %v310
        %327 = vst.msk [vmem:[%s321 + $0x41] sm:$0x7f] %vm322, %v311
        %328 = vst.msk [vmem:[%s321 + $0x51] sm:$0x7f] %vm322, %v312
        %329 = vst.msk [vmem:[%s321 + $0x61] sm:$0x7f] %vm322, %v313
        %330 = vst.msk [vmem:[%s321 + $0x91] sm:$0x7f] %vm322, %v314
        %331 = vst.msk [vmem:[%s321 + $0xa1] sm:$0x7f] %vm322, %v315
        %332 = vst.msk [vmem:[%s321 + $0xb1] sm:$0x7f] %vm322, %v316
        %333 = vst.msk [vmem:[%s321 + $0xc1] sm:$0x7f] %vm322, %v317
        %334 = vst.msk [vmem:[%s321 + $0xd1] sm:$0x7f] %vm322, %v318
        %335 = vst.msk [vmem:[%s321 + $0xe1] sm:$0x7f] %vm322, %v319
        %336 = vst.msk [vmem:[%s321 + $0xf1] sm:$0x7f] %vm322, %v320
        %v337 = vld [vmem:[#allocation2] sm:$0xff]
        %v338 = vld [vmem:[#allocation2 + $0x8] sm:$0x1]
        %v339 = vld [vmem:[#allocation2 + $0x10] sm:$0xff]
        %v340 = vld [vmem:[#allocation2 + $0x18] sm:$0x1]
        %v341 = vld [vmem:[#allocation2 + $0x20] sm:$0xff]
        %v342 = vld [vmem:[#allocation2 + $0x28] sm:$0x1]
        %v343 = vld [vmem:[#allocation2 + $0x30] sm:$0xff]
        %v344 = vld [vmem:[#allocation2 + $0x38] sm:$0x1]
        %v345 = vld [vmem:[#allocation2 + $0x40] sm:$0xff]
        %v346 = vld [vmem:[#allocation2 + $0x48] sm:$0x1]
        %v347 = vld [vmem:[#allocation2 + $0x50] sm:$0xff]
        %v348 = vld [vmem:[#allocation2 + $0x58] sm:$0x1]
        %v349 = vld [vmem:[#allocation2 + $0x60] sm:$0xff]
        %v350 = vld [vmem:[#allocation2 + $0x68] sm:$0x1]
        %v351 = vld [vmem:[#allocation2 + $0x70] sm:$0xff]
        %v352 = vld [vmem:[#allocation2 + $0x78] sm:$0x1]
        %v353 = vld [vmem:[#allocation2 + $0x80] sm:$0xff]
        %v354 = vld [vmem:[#allocation2 + $0x88] sm:$0x1]
        %v355 = vld [vmem:[#allocation2 + $0x90] sm:$0xff]
        %v356 = vld [vmem:[#allocation2 + $0x98] sm:$0x1]
        %v357 = vld [vmem:[#allocation2 + $0xa0] sm:$0xff]
        %v358 = vld [vmem:[#allocation2 + $0xa8] sm:$0x1]
        %v359 = vld [vmem:[#allocation2 + $0xb0] sm:$0xff]
        %v360 = vld [vmem:[#allocation2 + $0xb8] sm:$0x1]
        %v361 = vld [vmem:[#allocation2 + $0xc0] sm:$0xff]
        %v362 = vld [vmem:[#allocation2 + $0xc8] sm:$0x1]
        %v363 = vld [vmem:[#allocation2 + $0xd0] sm:$0xff]
        %v364 = vld [vmem:[#allocation2 + $0xd8] sm:$0x1]
        %v365 = vld [vmem:[#allocation2 + $0xe0] sm:$0xff]
        %v366 = vld [vmem:[#allocation2 + $0xe8] sm:$0x1]
        %v367 = vld [vmem:[#allocation2 + $0xf0] sm:$0xff]
        %v368 = vld [vmem:[#allocation2 + $0xf8] sm:$0x1]
        %v369 = vld [vmem:[#allocation2 + $0x100] sm:$0xff]
        %v370 = vld [vmem:[#allocation2 + $0x108] sm:$0x1]
        %v371 = vld [vmem:[#allocation2 + $0x110] sm:$0xff]
        %v372 = vld [vmem:[#allocation2 + $0x118] sm:$0x1]
        %v373 = vld [vmem:[%s1] sm:$0x7]
        %v374 = vld [vmem:[%s1 + $0x4] sm:$0x7]
        %v375 = vld [vmem:[%s1 + $0x8] sm:$0x7]
        %v376 = vperm.slane %v373, 0
        %v377 = vmul.f32 %v337, %v376
        %v378 = vmul.f32 %v339, %v376
        %v379 = vmul.f32 %v341, %v376
        %v380 = vmul.f32 %v343, %v376
        %v381 = vmul.f32 %v345, %v376
        %v382 = vmul.f32 %v347, %v376
        %v383 = vmul.f32 %v349, %v376
        %v384 = vmul.f32 %v355, %v376
        %v385 = vmul.f32 %v357, %v376
        %v386 = vmul.f32 %v359, %v376
        %v387 = vmul.f32 %v361, %v376
        %v388 = vmul.f32 %v363, %v376
        %v389 = vmul.f32 %v365, %v376
        %v390 = vmul.f32 %v367, %v376
        %v391 = vperm.slane %v373, 1
        %v392 = vmul.f32 %v337, %v391
        %v393 = vmul.f32 %v339, %v391
        %v394 = vmul.f32 %v341, %v391
        %v395 = vmul.f32 %v343, %v391
        %v396 = vmul.f32 %v345, %v391
        %v397 = vmul.f32 %v347, %v391
        %v398 = vmul.f32 %v349, %v391
        %v399 = vmul.f32 %v355, %v391
        %v400 = vmul.f32 %v357, %v391
        %v401 = vmul.f32 %v359, %v391
        %v402 = vmul.f32 %v361, %v391
        %v403 = vmul.f32 %v363, %v391
        %v404 = vmul.f32 %v365, %v391
        %v405 = vmul.f32 %v367, %v391
        %v420 = vrot.slane %v392, 1
        %v421 = vrot.slane %v393, 1
        %v422 = vrot.slane %v394, 1
        %v423 = vrot.slane %v395, 1
        %v424 = vrot.slane %v396, 1
        %v425 = vrot.slane %v397, 1
        %v426 = vrot.slane %v398, 1
        %v427 = vrot.slane %v399, 1
        %v428 = vrot.slane %v400, 1
        %v429 = vrot.slane %v401, 1
        %v430 = vrot.slane %v402, 1
        %v431 = vrot.slane %v403, 1
        %v432 = vrot.slane %v404, 1
        %v433 = vrot.slane %v405, 1
        %v448 = vadd.f32 %v377, %v420
        %v449 = vadd.f32 %v378, %v421
        %v450 = vadd.f32 %v379, %v422
        %v451 = vadd.f32 %v380, %v423
        %v452 = vadd.f32 %v381, %v424
        %v453 = vadd.f32 %v382, %v425
        %v454 = vadd.f32 %v383, %v426
        %v455 = vadd.f32 %v384, %v427
        %v456 = vadd.f32 %v385, %v428
        %v457 = vadd.f32 %v386, %v429
        %v458 = vadd.f32 %v387, %v430
        %v459 = vadd.f32 %v388, %v431
        %v460 = vadd.f32 %v389, %v432
        %v461 = vadd.f32 %v390, %v433
        %v462 = vperm.slane %v373, 2
        %v463 = vmul.f32 %v337, %v462
        %v464 = vmul.f32 %v338, %v462
        %v465 = vmul.f32 %v339, %v462
        %v466 = vmul.f32 %v340, %v462
        %v467 = vmul.f32 %v341, %v462
        %v468 = vmul.f32 %v342, %v462
        %v469 = vmul.f32 %v343, %v462
        %v470 = vmul.f32 %v344, %v462
        %v471 = vmul.f32 %v345, %v462
        %v472 = vmul.f32 %v346, %v462
        %v473 = vmul.f32 %v347, %v462
        %v474 = vmul.f32 %v348, %v462
        %v475 = vmul.f32 %v349, %v462
        %v476 = vmul.f32 %v350, %v462
        %v477 = vmul.f32 %v355, %v462
        %v478 = vmul.f32 %v356, %v462
        %v479 = vmul.f32 %v357, %v462
        %v480 = vmul.f32 %v358, %v462
        %v481 = vmul.f32 %v359, %v462
        %v482 = vmul.f32 %v360, %v462
        %v483 = vmul.f32 %v361, %v462
        %v484 = vmul.f32 %v362, %v462
        %v485 = vmul.f32 %v363, %v462
        %v486 = vmul.f32 %v364, %v462
        %v487 = vmul.f32 %v365, %v462
        %v488 = vmul.f32 %v366, %v462
        %v489 = vmul.f32 %v367, %v462
        %v490 = vmul.f32 %v368, %v462
        %vm519 = vcmask 1045504
        %v520 = vrot.slane %v463, 2
        %v521 = vrot.slane %v464, 2
        %v522 = vsel %vm519, %v520, %v521
        %v523 = vrot.slane %v465, 2
        %v524 = vrot.slane %v466, 2
        %v525 = vsel %vm519, %v523, %v524
        %v526 = vrot.slane %v467, 2
        %v527 = vrot.slane %v468, 2
        %v528 = vsel %vm519, %v526, %v527
        %v529 = vrot.slane %v469, 2
        %v530 = vrot.slane %v470, 2
        %v531 = vsel %vm519, %v529, %v530
        %v532 = vrot.slane %v471, 2
        %v533 = vrot.slane %v472, 2
        %v534 = vsel %vm519, %v532, %v533
        %v535 = vrot.slane %v473, 2
        %v536 = vrot.slane %v474, 2
        %v537 = vsel %vm519, %v535, %v536
        %v538 = vrot.slane %v475, 2
        %v539 = vrot.slane %v476, 2
        %v540 = vsel %vm519, %v538, %v539
        %v541 = vrot.slane %v477, 2
        %v542 = vrot.slane %v478, 2
        %v543 = vsel %vm519, %v541, %v542
        %v544 = vrot.slane %v479, 2
        %v545 = vrot.slane %v480, 2
        %v546 = vsel %vm519, %v544, %v545
        %v547 = vrot.slane %v481, 2
        %v548 = vrot.slane %v482, 2
        %v549 = vsel %vm519, %v547, %v548
        %v550 = vrot.slane %v483, 2
        %v551 = vrot.slane %v484, 2
        %v552 = vsel %vm519, %v550, %v551
        %v553 = vrot.slane %v485, 2
        %v554 = vrot.slane %v486, 2
        %v555 = vsel %vm519, %v553, %v554
        %v556 = vrot.slane %v487, 2
        %v557 = vrot.slane %v488, 2
        %v558 = vsel %vm519, %v556, %v557
        %v559 = vrot.slane %v489, 2
        %v560 = vrot.slane %v490, 2
        %v561 = vsel %vm519, %v559, %v560
        %v576 = vadd.f32 %v448, %v522
        %v577 = vadd.f32 %v449, %v525
        %v578 = vadd.f32 %v450, %v528
        %v579 = vadd.f32 %v451, %v531
        %v580 = vadd.f32 %v452, %v534
        %v581 = vadd.f32 %v453, %v537
        %v582 = vadd.f32 %v454, %v540
        %v583 = vadd.f32 %v455, %v543
        %v584 = vadd.f32 %v456, %v546
        %v585 = vadd.f32 %v457, %v549
        %v586 = vadd.f32 %v458, %v552
        %v587 = vadd.f32 %v459, %v555
        %v588 = vadd.f32 %v460, %v558
        %v589 = vadd.f32 %v461, %v561
        %v590 = vperm.slane %v374, 0
        %v591 = vmul.f32 %v339, %v590
        %v592 = vmul.f32 %v341, %v590
        %v593 = vmul.f32 %v343, %v590
        %v594 = vmul.f32 %v345, %v590
        %v595 = vmul.f32 %v347, %v590
        %v596 = vmul.f32 %v349, %v590
        %v597 = vmul.f32 %v351, %v590
        %v598 = vmul.f32 %v357, %v590
        %v599 = vmul.f32 %v359, %v590
        %v600 = vmul.f32 %v361, %v590
        %v601 = vmul.f32 %v363, %v590
        %v602 = vmul.f32 %v365, %v590
        %v603 = vmul.f32 %v367, %v590
        %v604 = vmul.f32 %v369, %v590
        %v605 = vadd.f32 %v576, %v591
        %v606 = vadd.f32 %v577, %v592
        %v607 = vadd.f32 %v578, %v593
        %v608 = vadd.f32 %v579, %v594
        %v609 = vadd.f32 %v580, %v595
        %v610 = vadd.f32 %v581, %v596
        %v611 = vadd.f32 %v582, %v597
        %v612 = vadd.f32 %v583, %v598
        %v613 = vadd.f32 %v584, %v599
        %v614 = vadd.f32 %v585, %v600
        %v615 = vadd.f32 %v586, %v601
        %v616 = vadd.f32 %v587, %v602
        %v617 = vadd.f32 %v588, %v603
        %v618 = vadd.f32 %v589, %v604
        %v619 = vperm.slane %v374, 1
        %v620 = vmul.f32 %v339, %v619
        %v621 = vmul.f32 %v341, %v619
        %v622 = vmul.f32 %v343, %v619
        %v623 = vmul.f32 %v345, %v619
        %v624 = vmul.f32 %v347, %v619
        %v625 = vmul.f32 %v349, %v619
        %v626 = vmul.f32 %v351, %v619
        %v627 = vmul.f32 %v357, %v619
        %v628 = vmul.f32 %v359, %v619
        %v629 = vmul.f32 %v361, %v619
        %v630 = vmul.f32 %v363, %v619
        %v631 = vmul.f32 %v365, %v619
        %v632 = vmul.f32 %v367, %v619
        %v633 = vmul.f32 %v369, %v619
        %v648 = vrot.slane %v620, 1
        %v649 = vrot.slane %v621, 1
        %v650 = vrot.slane %v622, 1
        %v651 = vrot.slane %v623, 1
        %v652 = vrot.slane %v624, 1
        %v653 = vrot.slane %v625, 1
        %v654 = vrot.slane %v626, 1
        %v655 = vrot.slane %v627, 1
        %v656 = vrot.slane %v628, 1
        %v657 = vrot.slane %v629, 1
        %v658 = vrot.slane %v630, 1
        %v659 = vrot.slane %v631, 1
        %v660 = vrot.slane %v632, 1
        %v661 = vrot.slane %v633, 1
        %v676 = vadd.f32 %v605, %v648
        %v677 = vadd.f32 %v606, %v649
        %v678 = vadd.f32 %v607, %v650
        %v679 = vadd.f32 %v608, %v651
        %v680 = vadd.f32 %v609, %v652
        %v681 = vadd.f32 %v610, %v653
        %v682 = vadd.f32 %v611, %v654
        %v683 = vadd.f32 %v612, %v655
        %v684 = vadd.f32 %v613, %v656
        %v685 = vadd.f32 %v614, %v657
        %v686 = vadd.f32 %v615, %v658
        %v687 = vadd.f32 %v616, %v659
        %v688 = vadd.f32 %v617, %v660
        %v689 = vadd.f32 %v618, %v661
        %v690 = vperm.slane %v374, 2
        %v691 = vmul.f32 %v339, %v690
        %v692 = vmul.f32 %v340, %v690
        %v693 = vmul.f32 %v341, %v690
        %v694 = vmul.f32 %v342, %v690
        %v695 = vmul.f32 %v343, %v690
        %v696 = vmul.f32 %v344, %v690
        %v697 = vmul.f32 %v345, %v690
        %v698 = vmul.f32 %v346, %v690
        %v699 = vmul.f32 %v347, %v690
        %v700 = vmul.f32 %v348, %v690
        %v701 = vmul.f32 %v349, %v690
        %v702 = vmul.f32 %v350, %v690
        %v703 = vmul.f32 %v351, %v690
        %v704 = vmul.f32 %v352, %v690
        %v705 = vmul.f32 %v357, %v690
        %v706 = vmul.f32 %v358, %v690
        %v707 = vmul.f32 %v359, %v690
        %v708 = vmul.f32 %v360, %v690
        %v709 = vmul.f32 %v361, %v690
        %v710 = vmul.f32 %v362, %v690
        %v711 = vmul.f32 %v363, %v690
        %v712 = vmul.f32 %v364, %v690
        %v713 = vmul.f32 %v365, %v690
        %v714 = vmul.f32 %v366, %v690
        %v715 = vmul.f32 %v367, %v690
        %v716 = vmul.f32 %v368, %v690
        %v717 = vmul.f32 %v369, %v690
        %v718 = vmul.f32 %v370, %v690
        %v747 = vrot.slane %v691, 2
        %v748 = vrot.slane %v692, 2
        %v749 = vsel %vm519, %v747, %v748
        %v750 = vrot.slane %v693, 2
        %v751 = vrot.slane %v694, 2
        %v752 = vsel %vm519, %v750, %v751
        %v753 = vrot.slane %v695, 2
        %v754 = vrot.slane %v696, 2
        %v755 = vsel %vm519, %v753, %v754
        %v756 = vrot.slane %v697, 2
        %v757 = vrot.slane %v698, 2
        %v758 = vsel %vm519, %v756, %v757
        %v759 = vrot.slane %v699, 2
        %v760 = vrot.slane %v700, 2
        %v761 = vsel %vm519, %v759, %v760
        %v762 = vrot.slane %v701, 2
        %v763 = vrot.slane %v702, 2
        %v764 = vsel %vm519, %v762, %v763
        %v765 = vrot.slane %v703, 2
        %v766 = vrot.slane %v704, 2
        %v767 = vsel %vm519, %v765, %v766
        %v768 = vrot.slane %v705, 2
        %v769 = vrot.slane %v706, 2
        %v770 = vsel %vm519, %v768, %v769
        %v771 = vrot.slane %v707, 2
        %v772 = vrot.slane %v708, 2
        %v773 = vsel %vm519, %v771, %v772
        %v774 = vrot.slane %v709, 2
        %v775 = vrot.slane %v710, 2
        %v776 = vsel %vm519, %v774, %v775
        %v777 = vrot.slane %v711, 2
        %v778 = vrot.slane %v712, 2
        %v779 = vsel %vm519, %v777, %v778
        %v780 = vrot.slane %v713, 2
        %v781 = vrot.slane %v714, 2
        %v782 = vsel %vm519, %v780, %v781
        %v783 = vrot.slane %v715, 2
        %v784 = vrot.slane %v716, 2
        %v785 = vsel %vm519, %v783, %v784
        %v786 = vrot.slane %v717, 2
        %v787 = vrot.slane %v718, 2
        %v788 = vsel %vm519, %v786, %v787
        %v803 = vadd.f32 %v676, %v749
        %v804 = vadd.f32 %v677, %v752
        %v805 = vadd.f32 %v678, %v755
        %v806 = vadd.f32 %v679, %v758
        %v807 = vadd.f32 %v680, %v761
        %v808 = vadd.f32 %v681, %v764
        %v809 = vadd.f32 %v682, %v767
        %v810 = vadd.f32 %v683, %v770
        %v811 = vadd.f32 %v684, %v773
        %v812 = vadd.f32 %v685, %v776
        %v813 = vadd.f32 %v686, %v779
        %v814 = vadd.f32 %v687, %v782
        %v815 = vadd.f32 %v688, %v785
        %v816 = vadd.f32 %v689, %v788
        %v817 = vperm.slane %v375, 0
        %v818 = vmul.f32 %v341, %v817
        %v819 = vmul.f32 %v343, %v817
        %v820 = vmul.f32 %v345, %v817
        %v821 = vmul.f32 %v347, %v817
        %v822 = vmul.f32 %v349, %v817
        %v823 = vmul.f32 %v351, %v817
        %v824 = vmul.f32 %v353, %v817
        %v825 = vmul.f32 %v359, %v817
        %v826 = vmul.f32 %v361, %v817
        %v827 = vmul.f32 %v363, %v817
        %v828 = vmul.f32 %v365, %v817
        %v829 = vmul.f32 %v367, %v817
        %v830 = vmul.f32 %v369, %v817
        %v831 = vmul.f32 %v371, %v817
        %v832 = vadd.f32 %v803, %v818
        %v833 = vadd.f32 %v804, %v819
        %v834 = vadd.f32 %v805, %v820
        %v835 = vadd.f32 %v806, %v821
        %v836 = vadd.f32 %v807, %v822
        %v837 = vadd.f32 %v808, %v823
        %v838 = vadd.f32 %v809, %v824
        %v839 = vadd.f32 %v810, %v825
        %v840 = vadd.f32 %v811, %v826
        %v841 = vadd.f32 %v812, %v827
        %v842 = vadd.f32 %v813, %v828
        %v843 = vadd.f32 %v814, %v829
        %v844 = vadd.f32 %v815, %v830
        %v845 = vadd.f32 %v816, %v831
        %v846 = vperm.slane %v375, 1
        %v847 = vmul.f32 %v341, %v846
        %v848 = vmul.f32 %v343, %v846
        %v849 = vmul.f32 %v345, %v846
        %v850 = vmul.f32 %v347, %v846
        %v851 = vmul.f32 %v349, %v846
        %v852 = vmul.f32 %v351, %v846
        %v853 = vmul.f32 %v353, %v846
        %v854 = vmul.f32 %v359, %v846
        %v855 = vmul.f32 %v361, %v846
        %v856 = vmul.f32 %v363, %v846
        %v857 = vmul.f32 %v365, %v846
        %v858 = vmul.f32 %v367, %v846
        %v859 = vmul.f32 %v369, %v846
        %v860 = vmul.f32 %v371, %v846
        %v875 = vrot.slane %v847, 1
        %v876 = vrot.slane %v848, 1
        %v877 = vrot.slane %v849, 1
        %v878 = vrot.slane %v850, 1
        %v879 = vrot.slane %v851, 1
        %v880 = vrot.slane %v852, 1
        %v881 = vrot.slane %v853, 1
        %v882 = vrot.slane %v854, 1
        %v883 = vrot.slane %v855, 1
        %v884 = vrot.slane %v856, 1
        %v885 = vrot.slane %v857, 1
        %v886 = vrot.slane %v858, 1
        %v887 = vrot.slane %v859, 1
        %v888 = vrot.slane %v860, 1
        %v903 = vadd.f32 %v832, %v875
        %v904 = vadd.f32 %v833, %v876
        %v905 = vadd.f32 %v834, %v877
        %v906 = vadd.f32 %v835, %v878
        %v907 = vadd.f32 %v836, %v879
        %v908 = vadd.f32 %v837, %v880
        %v909 = vadd.f32 %v838, %v881
        %v910 = vadd.f32 %v839, %v882
        %v911 = vadd.f32 %v840, %v883
        %v912 = vadd.f32 %v841, %v884
        %v913 = vadd.f32 %v842, %v885
        %v914 = vadd.f32 %v843, %v886
        %v915 = vadd.f32 %v844, %v887
        %v916 = vadd.f32 %v845, %v888
        %v917 = vperm.slane %v375, 2
        %v918 = vmul.f32 %v341, %v917
        %v919 = vmul.f32 %v342, %v917
        %v920 = vmul.f32 %v343, %v917
        %v921 = vmul.f32 %v344, %v917
        %v922 = vmul.f32 %v345, %v917
        %v923 = vmul.f32 %v346, %v917
        %v924 = vmul.f32 %v347, %v917
        %v925 = vmul.f32 %v348, %v917
        %v926 = vmul.f32 %v349, %v917
        %v927 = vmul.f32 %v350, %v917
        %v928 = vmul.f32 %v351, %v917
        %v929 = vmul.f32 %v352, %v917
        %v930 = vmul.f32 %v353, %v917
        %v931 = vmul.f32 %v354, %v917
        %v932 = vmul.f32 %v359, %v917
        %v933 = vmul.f32 %v360, %v917
        %v934 = vmul.f32 %v361, %v917
        %v935 = vmul.f32 %v362, %v917
        %v936 = vmul.f32 %v363, %v917
        %v937 = vmul.f32 %v364, %v917
        %v938 = vmul.f32 %v365, %v917
        %v939 = vmul.f32 %v366, %v917
        %v940 = vmul.f32 %v367, %v917
        %v941 = vmul.f32 %v368, %v917
        %v942 = vmul.f32 %v369, %v917
        %v943 = vmul.f32 %v370, %v917
        %v944 = vmul.f32 %v371, %v917
        %v945 = vmul.f32 %v372, %v917
        %v974 = vrot.slane %v918, 2
        %v975 = vrot.slane %v919, 2
        %v976 = vsel %vm519, %v974, %v975
        %v977 = vrot.slane %v920, 2
        %v978 = vrot.slane %v921, 2
        %v979 = vsel %vm519, %v977, %v978
        %v980 = vrot.slane %v922, 2
        %v981 = vrot.slane %v923, 2
        %v982 = vsel %vm519, %v980, %v981
        %v983 = vrot.slane %v924, 2
        %v984 = vrot.slane %v925, 2
        %v985 = vsel %vm519, %v983, %v984
        %v986 = vrot.slane %v926, 2
        %v987 = vrot.slane %v927, 2
        %v988 = vsel %vm519, %v986, %v987
        %v989 = vrot.slane %v928, 2
        %v990 = vrot.slane %v929, 2
        %v991 = vsel %vm519, %v989, %v990
        %v992 = vrot.slane %v930, 2
        %v993 = vrot.slane %v931, 2
        %v994 = vsel %vm519, %v992, %v993
        %v995 = vrot.slane %v932, 2
        %v996 = vrot.slane %v933, 2
        %v997 = vsel %vm519, %v995, %v996
        %v998 = vrot.slane %v934, 2
        %v999 = vrot.slane %v935, 2
        %v1000 = vsel %vm519, %v998, %v999
        %v1001 = vrot.slane %v936, 2
        %v1002 = vrot.slane %v937, 2
        %v1003 = vsel %vm519, %v1001, %v1002
        %v1004 = vrot.slane %v938, 2
        %v1005 = vrot.slane %v939, 2
        %v1006 = vsel %vm519, %v1004, %v1005
        %v1007 = vrot.slane %v940, 2
        %v1008 = vrot.slane %v941, 2
        %v1009 = vsel %vm519, %v1007, %v1008
        %v1010 = vrot.slane %v942, 2
        %v1011 = vrot.slane %v943, 2
        %v1012 = vsel %vm519, %v1010, %v1011
        %v1013 = vrot.slane %v944, 2
        %v1014 = vrot.slane %v945, 2
        %v1015 = vsel %vm519, %v1013, %v1014
        %v1030 = vadd.f32 %v903, %v976
        %v1031 = vadd.f32 %v904, %v979
        %v1032 = vadd.f32 %v905, %v982
        %v1033 = vadd.f32 %v906, %v985
        %v1034 = vadd.f32 %v907, %v988
        %v1035 = vadd.f32 %v908, %v991
        %v1036 = vadd.f32 %v909, %v994
        %v1037 = vadd.f32 %v910, %v997
        %v1038 = vadd.f32 %v911, %v1000
        %v1039 = vadd.f32 %v912, %v1003
        %v1040 = vadd.f32 %v913, %v1006
        %v1041 = vadd.f32 %v914, %v1009
        %v1042 = vadd.f32 %v915, %v1012
        %v1043 = vadd.f32 %v916, %v1015
        %v1044 = vsel %vm322, %v1030, 0.0
        %1045 = vadd.xlane.f32.xlu0 %v1044
        %v1046 = vpop.xlane.xlu0 %1045
        %v1047 = vsel %vm322, %v1031, 0.0
        %1048 = vadd.xlane.f32.xlu0 %v1047
        %v1049 = vpop.xlane.xlu0 %1048
        %v1050 = vsel %vm322, %v1032, 0.0
        %1051 = vadd.xlane.f32.xlu0 %v1050
        %v1052 = vpop.xlane.xlu0 %1051
        %v1053 = vsel %vm322, %v1033, 0.0
        %1054 = vadd.xlane.f32.xlu0 %v1053
        %v1055 = vpop.xlane.xlu0 %1054
        %v1056 = vsel %vm322, %v1034, 0.0
        %1057 = vadd.xlane.f32.xlu0 %v1056
        %v1058 = vpop.xlane.xlu0 %1057
        %v1059 = vsel %vm322, %v1035, 0.0
        %1060 = vadd.xlane.f32.xlu0 %v1059
        %v1061 = vpop.xlane.xlu0 %1060
        %v1062 = vsel %vm322, %v1036, 0.0
        %1063 = vadd.xlane.f32.xlu0 %v1062
        %v1064 = vpop.xlane.xlu0 %1063
        %v1065 = vsel %vm322, %v1037, 0.0
        %1066 = vadd.xlane.f32.xlu0 %v1065
        %v1067 = vpop.xlane.xlu0 %1066
        %v1068 = vsel %vm322, %v1038, 0.0
        %1069 = vadd.xlane.f32.xlu0 %v1068
        %v1070 = vpop.xlane.xlu0 %1069
        %v1071 = vsel %vm322, %v1039, 0.0
        %1072 = vadd.xlane.f32.xlu0 %v1071
        %v1073 = vpop.xlane.xlu0 %1072
        %v1074 = vsel %vm322, %v1040, 0.0
        %1075 = vadd.xlane.f32.xlu0 %v1074
        %v1076 = vpop.xlane.xlu0 %1075
        %v1077 = vsel %vm322, %v1041, 0.0
        %1078 = vadd.xlane.f32.xlu0 %v1077
        %v1079 = vpop.xlane.xlu0 %1078
        %v1080 = vsel %vm322, %v1042, 0.0
        %1081 = vadd.xlane.f32.xlu0 %v1080
        %v1082 = vpop.xlane.xlu0 %1081
        %v1083 = vsel %vm322, %v1043, 0.0
        %1084 = vadd.xlane.f32.xlu0 %v1083
        %v1085 = vpop.xlane.xlu0 %1084
        %v1086 = vxor.u32 %v1046, 2147483648
        %v1087 = vxor.u32 %v1049, 2147483648
        %v1088 = vxor.u32 %v1052, 2147483648
        %v1089 = vxor.u32 %v1055, 2147483648
        %v1090 = vxor.u32 %v1058, 2147483648
        %v1091 = vxor.u32 %v1061, 2147483648
        %v1092 = vxor.u32 %v1064, 2147483648
        %v1093 = vxor.u32 %v1067, 2147483648
        %v1094 = vxor.u32 %v1070, 2147483648
        %v1095 = vxor.u32 %v1073, 2147483648
        %v1096 = vxor.u32 %v1076, 2147483648
        %v1097 = vxor.u32 %v1079, 2147483648
        %v1098 = vxor.u32 %v1082, 2147483648
        %v1099 = vxor.u32 %v1085, 2147483648
        %v1100 = vmul.f32 %v1086, 1.442695
        %v1101 = vpow.pop %v1100
        %v1102 = vmul.f32 %v1087, 1.442695
        %v1103 = vpow.pop %v1102
        %v1104 = vmul.f32 %v1088, 1.442695
        %v1105 = vpow.pop %v1104
        %v1106 = vmul.f32 %v1089, 1.442695
        %v1107 = vpow.pop %v1106
        %v1108 = vmul.f32 %v1090, 1.442695
        %v1109 = vpow.pop %v1108
        %v1110 = vmul.f32 %v1091, 1.442695
        %v1111 = vpow.pop %v1110
        %v1112 = vmul.f32 %v1092, 1.442695
        %v1113 = vpow.pop %v1112
        %v1114 = vmul.f32 %v1093, 1.442695
        %v1115 = vpow.pop %v1114
        %v1116 = vmul.f32 %v1094, 1.442695
        %v1117 = vpow.pop %v1116
        %v1118 = vmul.f32 %v1095, 1.442695
        %v1119 = vpow.pop %v1118
        %v1120 = vmul.f32 %v1096, 1.442695
        %v1121 = vpow.pop %v1120
        %v1122 = vmul.f32 %v1097, 1.442695
        %v1123 = vpow.pop %v1122
        %v1124 = vmul.f32 %v1098, 1.442695
        %v1125 = vpow.pop %v1124
        %v1126 = vmul.f32 %v1099, 1.442695
        %v1127 = vpow.pop %v1126
        %v1128 = vadd.f32 %v1101, 1.0
        %v1129 = vadd.f32 %v1103, 1.0
        %v1130 = vadd.f32 %v1105, 1.0
        %v1131 = vadd.f32 %v1107, 1.0
        %v1132 = vadd.f32 %v1109, 1.0
        %v1133 = vadd.f32 %v1111, 1.0
        %v1134 = vadd.f32 %v1113, 1.0
        %v1135 = vadd.f32 %v1115, 1.0
        %v1136 = vadd.f32 %v1117, 1.0
        %v1137 = vadd.f32 %v1119, 1.0
        %v1138 = vadd.f32 %v1121, 1.0
        %v1139 = vadd.f32 %v1123, 1.0
        %v1140 = vadd.f32 %v1125, 1.0
        %v1141 = vadd.f32 %v1127, 1.0
        %v1142 = vrcp.pop %v1128
        %v1143 = vmul.f32 %v1128, %v1142
        %v1144 = vsub.f32 1.0, %v1143
        %v1145 = vmul.f32 %v1142, %v1144
        %v1146 = vadd.f32 %v1142, %v1145
        %vm1147 = vweird.f32 %v1128
        %vm1148 = vweird.f32 %v1142
        %vm1149 = vmor %vm1147, %vm1148
        %v1150 = vsel %vm1149, %v1142, %v1146
        %v1151 = vand.u32 2147483647, %v1128
        %vm1152 = vcmp.eq.f32.partialorder %v1151, 8.507059e+37
        %v1153 = vand.u32 %v1128, 2147483648
        %v1154 = vor.u32 1.1754944e-38, %v1153
        %v1155 = vsel %vm1152, %v1154, %v1150
        %v1156 = vmul.f32 1.0, %v1155
        %v1157 = vrcp.pop %v1129
        %v1158 = vmul.f32 %v1129, %v1157
        %v1159 = vsub.f32 1.0, %v1158
        %v1160 = vmul.f32 %v1157, %v1159
        %v1161 = vadd.f32 %v1157, %v1160
        %vm1162 = vweird.f32 %v1129
        %vm1163 = vweird.f32 %v1157
        %vm1164 = vmor %vm1162, %vm1163
        %v1165 = vsel %vm1164, %v1157, %v1161
        %v1166 = vand.u32 2147483647, %v1129
        %vm1167 = vcmp.eq.f32.partialorder %v1166, 8.507059e+37
        %v1168 = vand.u32 %v1129, 2147483648
        %v1169 = vor.u32 1.1754944e-38, %v1168
        %v1170 = vsel %vm1167, %v1169, %v1165
        %v1171 = vmul.f32 1.0, %v1170
        %v1172 = vrcp.pop %v1130
        %v1173 = vmul.f32 %v1130, %v1172
        %v1174 = vsub.f32 1.0, %v1173
        %v1175 = vmul.f32 %v1172, %v1174
        %v1176 = vadd.f32 %v1172, %v1175
        %vm1177 = vweird.f32 %v1130
        %vm1178 = vweird.f32 %v1172
        %vm1179 = vmor %vm1177, %vm1178
        %v1180 = vsel %vm1179, %v1172, %v1176
        %v1181 = vand.u32 2147483647, %v1130
        %vm1182 = vcmp.eq.f32.partialorder %v1181, 8.507059e+37
        %v1183 = vand.u32 %v1130, 2147483648
        %v1184 = vor.u32 1.1754944e-38, %v1183
        %v1185 = vsel %vm1182, %v1184, %v1180
        %v1186 = vmul.f32 1.0, %v1185
        %v1187 = vrcp.pop %v1131
        %v1188 = vmul.f32 %v1131, %v1187
        %v1189 = vsub.f32 1.0, %v1188
        %v1190 = vmul.f32 %v1187, %v1189
        %v1191 = vadd.f32 %v1187, %v1190
        %vm1192 = vweird.f32 %v1131
        %vm1193 = vweird.f32 %v1187
        %vm1194 = vmor %vm1192, %vm1193
        %v1195 = vsel %vm1194, %v1187, %v1191
        %v1196 = vand.u32 2147483647, %v1131
        %vm1197 = vcmp.eq.f32.partialorder %v1196, 8.507059e+37
        %v1198 = vand.u32 %v1131, 2147483648
        %v1199 = vor.u32 1.1754944e-38, %v1198
        %v1200 = vsel %vm1197, %v1199, %v1195
        %v1201 = vmul.f32 1.0, %v1200
        %v1202 = vrcp.pop %v1132
        %v1203 = vmul.f32 %v1132, %v1202
        %v1204 = vsub.f32 1.0, %v1203
        %v1205 = vmul.f32 %v1202, %v1204
        %v1206 = vadd.f32 %v1202, %v1205
        %vm1207 = vweird.f32 %v1132
        %vm1208 = vweird.f32 %v1202
        %vm1209 = vmor %vm1207, %vm1208
        %v1210 = vsel %vm1209, %v1202, %v1206
        %v1211 = vand.u32 2147483647, %v1132
        %vm1212 = vcmp.eq.f32.partialorder %v1211, 8.507059e+37
        %v1213 = vand.u32 %v1132, 2147483648
        %v1214 = vor.u32 1.1754944e-38, %v1213
        %v1215 = vsel %vm1212, %v1214, %v1210
        %v1216 = vmul.f32 1.0, %v1215
        %v1217 = vrcp.pop %v1133
        %v1218 = vmul.f32 %v1133, %v1217
        %v1219 = vsub.f32 1.0, %v1218
        %v1220 = vmul.f32 %v1217, %v1219
        %v1221 = vadd.f32 %v1217, %v1220
        %vm1222 = vweird.f32 %v1133
        %vm1223 = vweird.f32 %v1217
        %vm1224 = vmor %vm1222, %vm1223
        %v1225 = vsel %vm1224, %v1217, %v1221
        %v1226 = vand.u32 2147483647, %v1133
        %vm1227 = vcmp.eq.f32.partialorder %v1226, 8.507059e+37
        %v1228 = vand.u32 %v1133, 2147483648
        %v1229 = vor.u32 1.1754944e-38, %v1228
        %v1230 = vsel %vm1227, %v1229, %v1225
        %v1231 = vmul.f32 1.0, %v1230
        %v1232 = vrcp.pop %v1134
        %v1233 = vmul.f32 %v1134, %v1232
        %v1234 = vsub.f32 1.0, %v1233
        %v1235 = vmul.f32 %v1232, %v1234
        %v1236 = vadd.f32 %v1232, %v1235
        %vm1237 = vweird.f32 %v1134
        %vm1238 = vweird.f32 %v1232
        %vm1239 = vmor %vm1237, %vm1238
        %v1240 = vsel %vm1239, %v1232, %v1236
        %v1241 = vand.u32 2147483647, %v1134
        %vm1242 = vcmp.eq.f32.partialorder %v1241, 8.507059e+37
        %v1243 = vand.u32 %v1134, 2147483648
        %v1244 = vor.u32 1.1754944e-38, %v1243
        %v1245 = vsel %vm1242, %v1244, %v1240
        %v1246 = vmul.f32 1.0, %v1245
        %v1247 = vrcp.pop %v1135
        %v1248 = vmul.f32 %v1135, %v1247
        %v1249 = vsub.f32 1.0, %v1248
        %v1250 = vmul.f32 %v1247, %v1249
        %v1251 = vadd.f32 %v1247, %v1250
        %vm1252 = vweird.f32 %v1135
        %vm1253 = vweird.f32 %v1247
        %vm1254 = vmor %vm1252, %vm1253
        %v1255 = vsel %vm1254, %v1247, %v1251
        %v1256 = vand.u32 2147483647, %v1135
        %vm1257 = vcmp.eq.f32.partialorder %v1256, 8.507059e+37
        %v1258 = vand.u32 %v1135, 2147483648
        %v1259 = vor.u32 1.1754944e-38, %v1258
        %v1260 = vsel %vm1257, %v1259, %v1255
        %v1261 = vmul.f32 1.0, %v1260
        %v1262 = vrcp.pop %v1136
        %v1263 = vmul.f32 %v1136, %v1262
        %v1264 = vsub.f32 1.0, %v1263
        %v1265 = vmul.f32 %v1262, %v1264
        %v1266 = vadd.f32 %v1262, %v1265
        %vm1267 = vweird.f32 %v1136
        %vm1268 = vweird.f32 %v1262
        %vm1269 = vmor %vm1267, %vm1268
        %v1270 = vsel %vm1269, %v1262, %v1266
        %v1271 = vand.u32 2147483647, %v1136
        %vm1272 = vcmp.eq.f32.partialorder %v1271, 8.507059e+37
        %v1273 = vand.u32 %v1136, 2147483648
        %v1274 = vor.u32 1.1754944e-38, %v1273
        %v1275 = vsel %vm1272, %v1274, %v1270
        %v1276 = vmul.f32 1.0, %v1275
        %v1277 = vrcp.pop %v1137
        %v1278 = vmul.f32 %v1137, %v1277
        %v1279 = vsub.f32 1.0, %v1278
        %v1280 = vmul.f32 %v1277, %v1279
        %v1281 = vadd.f32 %v1277, %v1280
        %vm1282 = vweird.f32 %v1137
        %vm1283 = vweird.f32 %v1277
        %vm1284 = vmor %vm1282, %vm1283
        %v1285 = vsel %vm1284, %v1277, %v1281
        %v1286 = vand.u32 2147483647, %v1137
        %vm1287 = vcmp.eq.f32.partialorder %v1286, 8.507059e+37
        %v1288 = vand.u32 %v1137, 2147483648
        %v1289 = vor.u32 1.1754944e-38, %v1288
        %v1290 = vsel %vm1287, %v1289, %v1285
        %v1291 = vmul.f32 1.0, %v1290
        %v1292 = vrcp.pop %v1138
        %v1293 = vmul.f32 %v1138, %v1292
        %v1294 = vsub.f32 1.0, %v1293
        %v1295 = vmul.f32 %v1292, %v1294
        %v1296 = vadd.f32 %v1292, %v1295
        %vm1297 = vweird.f32 %v1138
        %vm1298 = vweird.f32 %v1292
        %vm1299 = vmor %vm1297, %vm1298
        %v1300 = vsel %vm1299, %v1292, %v1296
        %v1301 = vand.u32 2147483647, %v1138
        %vm1302 = vcmp.eq.f32.partialorder %v1301, 8.507059e+37
        %v1303 = vand.u32 %v1138, 2147483648
        %v1304 = vor.u32 1.1754944e-38, %v1303
        %v1305 = vsel %vm1302, %v1304, %v1300
        %v1306 = vmul.f32 1.0, %v1305
        %v1307 = vrcp.pop %v1139
        %v1308 = vmul.f32 %v1139, %v1307
        %v1309 = vsub.f32 1.0, %v1308
        %v1310 = vmul.f32 %v1307, %v1309
        %v1311 = vadd.f32 %v1307, %v1310
        %vm1312 = vweird.f32 %v1139
        %vm1313 = vweird.f32 %v1307
        %vm1314 = vmor %vm1312, %vm1313
        %v1315 = vsel %vm1314, %v1307, %v1311
        %v1316 = vand.u32 2147483647, %v1139
        %vm1317 = vcmp.eq.f32.partialorder %v1316, 8.507059e+37
        %v1318 = vand.u32 %v1139, 2147483648
        %v1319 = vor.u32 1.1754944e-38, %v1318
        %v1320 = vsel %vm1317, %v1319, %v1315
        %v1321 = vmul.f32 1.0, %v1320
        %v1322 = vrcp.pop %v1140
        %v1323 = vmul.f32 %v1140, %v1322
        %v1324 = vsub.f32 1.0, %v1323
        %v1325 = vmul.f32 %v1322, %v1324
        %v1326 = vadd.f32 %v1322, %v1325
        %vm1327 = vweird.f32 %v1140
        %vm1328 = vweird.f32 %v1322
        %vm1329 = vmor %vm1327, %vm1328
        %v1330 = vsel %vm1329, %v1322, %v1326
        %v1331 = vand.u32 2147483647, %v1140
        %vm1332 = vcmp.eq.f32.partialorder %v1331, 8.507059e+37
        %v1333 = vand.u32 %v1140, 2147483648
        %v1334 = vor.u32 1.1754944e-38, %v1333
        %v1335 = vsel %vm1332, %v1334, %v1330
        %v1336 = vmul.f32 1.0, %v1335
        %v1337 = vrcp.pop %v1141
        %v1338 = vmul.f32 %v1141, %v1337
        %v1339 = vsub.f32 1.0, %v1338
        %v1340 = vmul.f32 %v1337, %v1339
        %v1341 = vadd.f32 %v1337, %v1340
        %vm1342 = vweird.f32 %v1141
        %vm1343 = vweird.f32 %v1337
        %vm1344 = vmor %vm1342, %vm1343
        %v1345 = vsel %vm1344, %v1337, %v1341
        %v1346 = vand.u32 2147483647, %v1141
        %vm1347 = vcmp.eq.f32.partialorder %v1346, 8.507059e+37
        %v1348 = vand.u32 %v1141, 2147483648
        %v1349 = vor.u32 1.1754944e-38, %v1348
        %v1350 = vsel %vm1347, %v1349, %v1345
        %v1351 = vmul.f32 1.0, %v1350
        %v1352 = vld [vmem:[%s2] sm:$0x7f]
        %v1353 = vld [vmem:[%s2 + $0x8] sm:$0x7f]
        %v1354 = vld [vmem:[%s2 + $0x10] sm:$0x7f]
        %v1355 = vld [vmem:[%s2 + $0x18] sm:$0x7f]
        %v1356 = vld [vmem:[%s2 + $0x20] sm:$0x7f]
        %v1357 = vld [vmem:[%s2 + $0x28] sm:$0x7f]
        %v1358 = vld [vmem:[%s2 + $0x30] sm:$0x7f]
        %v1359 = vld [vmem:[%s2 + $0x38] sm:$0x7f]
        %v1360 = vld [vmem:[%s2 + $0x40] sm:$0x7f]
        %v1361 = vld [vmem:[%s2 + $0x48] sm:$0x7f]
        %v1362 = vld [vmem:[%s2 + $0x50] sm:$0x7f]
        %v1363 = vld [vmem:[%s2 + $0x58] sm:$0x7f]
        %v1364 = vld [vmem:[%s2 + $0x60] sm:$0x7f]
        %v1365 = vld [vmem:[%s2 + $0x68] sm:$0x7f]
        %v1367 = vlaneseq
        %v1368 = vand.u32 %v1367, 127
        %v1369 = vperm.slane %v1171, %v1368
        %vm1370 = vcmask 56320
        %v1371 = vsel %vm1370, %v1369, 0
        %vm1373 = vcmask 1046528
        %v1375 = vsel %vm1373, %v1354, 0
        %v1378 = vsel %vm1373, %v1355, 0
        %1380 = vmatpush.msra.mxu0 0.0
        %1381 = vmatpush.msra.mxu0 0.0
        %1382 = vmatpush.msra.mxu0 0.0
        %1383 = vmatpush.msra.mxu0 0.0
        %1384 = vmatpush.msra.mxu0 0.0
        %1385 = vmatpush.msra.mxu0 0.0
        %1386 = vmatpush.msra.mxu0 0.0
        %1387 = vmatpush.msra.mxu0 0.0
        %1388 = vmatpush.msra.mxu0 0.0
        %1389 = vmatpush.msra.mxu0 0.0
        %1390 = vmatpush.msra.mxu0 0.0
        %1391 = vmatpush.msra.mxu0 0.0
        %1392 = vmatpush.msra.mxu0 0.0
        %1393 = vmatpush.msra.mxu0 0.0
        %1394 = vmatpush.msra.mxu0 0.0
        %1395 = vmatpush.msra.mxu0 %v1375
        %1396 = vmatmul.f32.gmra.mxu0 %v1371
        %v1397 = vpop.f32.mrf.mxu0
        %v1398 = vadd.f32 0.0, %v1397
        %1399 = vdwg.mxu0
        %1400 = vmatpush.msra.mxu0 0.0
        %1401 = vmatpush.msra.mxu0 0.0
        %1402 = vmatpush.msra.mxu0 0.0
        %1403 = vmatpush.msra.mxu0 0.0
        %1404 = vmatpush.msra.mxu0 0.0
        %1405 = vmatpush.msra.mxu0 0.0
        %1406 = vmatpush.msra.mxu0 0.0
        %1407 = vmatpush.msra.mxu0 0.0
        %1408 = vmatpush.msra.mxu0 0.0
        %1409 = vmatpush.msra.mxu0 0.0
        %1410 = vmatpush.msra.mxu0 0.0
        %1411 = vmatpush.msra.mxu0 0.0
        %1412 = vmatpush.msra.mxu0 0.0
        %1413 = vmatpush.msra.mxu0 0.0
        %1414 = vmatpush.msra.mxu0 0.0
        %1415 = vmatpush.msra.mxu0 %v1378
        %1416 = vmatmul.f32.gmra.mxu0 %v1371
        %v1417 = vpop.f32.mrf.mxu0
        %v1418 = vadd.f32 0.0, %v1417
        %1419 = vdwg.mxu0
        %v1421 = vperm.slane %v1156, %v1368
        %v1422 = vsel %vm1370, %v1421, 0
        %v1425 = vsel %vm1373, %v1352, 0
        %v1428 = vsel %vm1373, %v1353, 0
        %1430 = vmatpush.msra.mxu0 0.0
        %1431 = vmatpush.msra.mxu0 0.0
        %1432 = vmatpush.msra.mxu0 0.0
        %1433 = vmatpush.msra.mxu0 0.0
        %1434 = vmatpush.msra.mxu0 0.0
        %1435 = vmatpush.msra.mxu0 0.0
        %1436 = vmatpush.msra.mxu0 0.0
        %1437 = vmatpush.msra.mxu0 0.0
        %1438 = vmatpush.msra.mxu0 0.0
        %1439 = vmatpush.msra.mxu0 0.0
        %1440 = vmatpush.msra.mxu0 0.0
        %1441 = vmatpush.msra.mxu0 0.0
        %1442 = vmatpush.msra.mxu0 0.0
        %1443 = vmatpush.msra.mxu0 0.0
        %1444 = vmatpush.msra.mxu0 0.0
        %1445 = vmatpush.msra.mxu0 %v1425
        %1446 = vmatmul.f32.gmra.mxu0 %v1422
        %v1447 = vpop.f32.mrf.mxu0
        %v1448 = vadd.f32 %v1398, %v1447
        %1449 = vdwg.mxu0
        %1450 = vmatpush.msra.mxu0 0.0
        %1451 = vmatpush.msra.mxu0 0.0
        %1452 = vmatpush.msra.mxu0 0.0
        %1453 = vmatpush.msra.mxu0 0.0
        %1454 = vmatpush.msra.mxu0 0.0
        %1455 = vmatpush.msra.mxu0 0.0
        %1456 = vmatpush.msra.mxu0 0.0
        %1457 = vmatpush.msra.mxu0 0.0
        %1458 = vmatpush.msra.mxu0 0.0
        %1459 = vmatpush.msra.mxu0 0.0
        %1460 = vmatpush.msra.mxu0 0.0
        %1461 = vmatpush.msra.mxu0 0.0
        %1462 = vmatpush.msra.mxu0 0.0
        %1463 = vmatpush.msra.mxu0 0.0
        %1464 = vmatpush.msra.mxu0 0.0
        %1465 = vmatpush.msra.mxu0 %v1428
        %1466 = vmatmul.f32.gmra.mxu0 %v1422
        %v1467 = vpop.f32.mrf.mxu0
        %v1468 = vadd.f32 %v1418, %v1467
        %1469 = vdwg.mxu0
        %v1471 = vperm.slane %v1186, %v1368
        %v1472 = vsel %vm1370, %v1471, 0
        %v1475 = vsel %vm1373, %v1356, 0
        %v1478 = vsel %vm1373, %v1357, 0
        %1480 = vmatpush.msra.mxu0 0.0
        %1481 = vmatpush.msra.mxu0 0.0
        %1482 = vmatpush.msra.mxu0 0.0
        %1483 = vmatpush.msra.mxu0 0.0
        %1484 = vmatpush.msra.mxu0 0.0
        %1485 = vmatpush.msra.mxu0 0.0
        %1486 = vmatpush.msra.mxu0 0.0
        %1487 = vmatpush.msra.mxu0 0.0
        %1488 = vmatpush.msra.mxu0 0.0
        %1489 = vmatpush.msra.mxu0 0.0
        %1490 = vmatpush.msra.mxu0 0.0
        %1491 = vmatpush.msra.mxu0 0.0
        %1492 = vmatpush.msra.mxu0 0.0
        %1493 = vmatpush.msra.mxu0 0.0
        %1494 = vmatpush.msra.mxu0 0.0
        %1495 = vmatpush.msra.mxu0 %v1475
        %1496 = vmatmul.f32.gmra.mxu0 %v1472
        %v1497 = vpop.f32.mrf.mxu0
        %v1498 = vadd.f32 0.0, %v1497
        %1499 = vdwg.mxu0
        %1500 = vmatpush.msra.mxu0 0.0
        %1501 = vmatpush.msra.mxu0 0.0
        %1502 = vmatpush.msra.mxu0 0.0
        %1503 = vmatpush.msra.mxu0 0.0
        %1504 = vmatpush.msra.mxu0 0.0
        %1505 = vmatpush.msra.mxu0 0.0
        %1506 = vmatpush.msra.mxu0 0.0
        %1507 = vmatpush.msra.mxu0 0.0
        %1508 = vmatpush.msra.mxu0 0.0
        %1509 = vmatpush.msra.mxu0 0.0
        %1510 = vmatpush.msra.mxu0 0.0
        %1511 = vmatpush.msra.mxu0 0.0
        %1512 = vmatpush.msra.mxu0 0.0
        %1513 = vmatpush.msra.mxu0 0.0
        %1514 = vmatpush.msra.mxu0 0.0
        %1515 = vmatpush.msra.mxu0 %v1478
        %1516 = vmatmul.f32.gmra.mxu0 %v1472
        %v1517 = vpop.f32.mrf.mxu0
        %v1518 = vadd.f32 0.0, %v1517
        %1519 = vdwg.mxu0
        %v1520 = vadd.f32 %v1448, %v1498
        %v1521 = vadd.f32 %v1468, %v1518
        %v1523 = vperm.slane %v1201, %v1368
        %v1524 = vsel %vm1370, %v1523, 0
        %v1527 = vsel %vm1373, %v1358, 0
        %v1530 = vsel %vm1373, %v1359, 0
        %1532 = vmatpush.msra.mxu0 0.0
        %1533 = vmatpush.msra.mxu0 0.0
        %1534 = vmatpush.msra.mxu0 0.0
        %1535 = vmatpush.msra.mxu0 0.0
        %1536 = vmatpush.msra.mxu0 0.0
        %1537 = vmatpush.msra.mxu0 0.0
        %1538 = vmatpush.msra.mxu0 0.0
        %1539 = vmatpush.msra.mxu0 0.0
        %1540 = vmatpush.msra.mxu0 0.0
        %1541 = vmatpush.msra.mxu0 0.0
        %1542 = vmatpush.msra.mxu0 0.0
        %1543 = vmatpush.msra.mxu0 0.0
        %1544 = vmatpush.msra.mxu0 0.0
        %1545 = vmatpush.msra.mxu0 0.0
        %1546 = vmatpush.msra.mxu0 0.0
        %1547 = vmatpush.msra.mxu0 %v1527
        %1548 = vmatmul.f32.gmra.mxu0 %v1524
        %v1549 = vpop.f32.mrf.mxu0
        %v1550 = vadd.f32 0.0, %v1549
        %1551 = vdwg.mxu0
        %1552 = vmatpush.msra.mxu0 0.0
        %1553 = vmatpush.msra.mxu0 0.0
        %1554 = vmatpush.msra.mxu0 0.0
        %1555 = vmatpush.msra.mxu0 0.0
        %1556 = vmatpush.msra.mxu0 0.0
        %1557 = vmatpush.msra.mxu0 0.0
        %1558 = vmatpush.msra.mxu0 0.0
        %1559 = vmatpush.msra.mxu0 0.0
        %1560 = vmatpush.msra.mxu0 0.0
        %1561 = vmatpush.msra.mxu0 0.0
        %1562 = vmatpush.msra.mxu0 0.0
        %1563 = vmatpush.msra.mxu0 0.0
        %1564 = vmatpush.msra.mxu0 0.0
        %1565 = vmatpush.msra.mxu0 0.0
        %1566 = vmatpush.msra.mxu0 0.0
        %1567 = vmatpush.msra.mxu0 %v1530
        %1568 = vmatmul.f32.gmra.mxu0 %v1524
        %v1569 = vpop.f32.mrf.mxu0
        %v1570 = vadd.f32 0.0, %v1569
        %1571 = vdwg.mxu0
        %v1572 = vadd.f32 %v1520, %v1550
        %v1573 = vadd.f32 %v1521, %v1570
        %v1575 = vperm.slane %v1216, %v1368
        %v1576 = vsel %vm1370, %v1575, 0
        %v1579 = vsel %vm1373, %v1360, 0
        %v1582 = vsel %vm1373, %v1361, 0
        %1584 = vmatpush.msra.mxu0 0.0
        %1585 = vmatpush.msra.mxu0 0.0
        %1586 = vmatpush.msra.mxu0 0.0
        %1587 = vmatpush.msra.mxu0 0.0
        %1588 = vmatpush.msra.mxu0 0.0
        %1589 = vmatpush.msra.mxu0 0.0
        %1590 = vmatpush.msra.mxu0 0.0
        %1591 = vmatpush.msra.mxu0 0.0
        %1592 = vmatpush.msra.mxu0 0.0
        %1593 = vmatpush.msra.mxu0 0.0
        %1594 = vmatpush.msra.mxu0 0.0
        %1595 = vmatpush.msra.mxu0 0.0
        %1596 = vmatpush.msra.mxu0 0.0
        %1597 = vmatpush.msra.mxu0 0.0
        %1598 = vmatpush.msra.mxu0 0.0
        %1599 = vmatpush.msra.mxu0 %v1579
        %1600 = vmatmul.f32.gmra.mxu0 %v1576
        %v1601 = vpop.f32.mrf.mxu0
        %v1602 = vadd.f32 0.0, %v1601
        %1603 = vdwg.mxu0
        %1604 = vmatpush.msra.mxu0 0.0
        %1605 = vmatpush.msra.mxu0 0.0
        %1606 = vmatpush.msra.mxu0 0.0
        %1607 = vmatpush.msra.mxu0 0.0
        %1608 = vmatpush.msra.mxu0 0.0
        %1609 = vmatpush.msra.mxu0 0.0
        %1610 = vmatpush.msra.mxu0 0.0
        %1611 = vmatpush.msra.mxu0 0.0
        %1612 = vmatpush.msra.mxu0 0.0
        %1613 = vmatpush.msra.mxu0 0.0
        %1614 = vmatpush.msra.mxu0 0.0
        %1615 = vmatpush.msra.mxu0 0.0
        %1616 = vmatpush.msra.mxu0 0.0
        %1617 = vmatpush.msra.mxu0 0.0
        %1618 = vmatpush.msra.mxu0 0.0
        %1619 = vmatpush.msra.mxu0 %v1582
        %1620 = vmatmul.f32.gmra.mxu0 %v1576
        %v1621 = vpop.f32.mrf.mxu0
        %v1622 = vadd.f32 0.0, %v1621
        %1623 = vdwg.mxu0
        %v1624 = vadd.f32 %v1572, %v1602
        %v1625 = vadd.f32 %v1573, %v1622
        %v1627 = vperm.slane %v1231, %v1368
        %v1628 = vsel %vm1370, %v1627, 0
        %v1631 = vsel %vm1373, %v1362, 0
        %v1634 = vsel %vm1373, %v1363, 0
        %1636 = vmatpush.msra.mxu0 0.0
        %1637 = vmatpush.msra.mxu0 0.0
        %1638 = vmatpush.msra.mxu0 0.0
        %1639 = vmatpush.msra.mxu0 0.0
        %1640 = vmatpush.msra.mxu0 0.0
        %1641 = vmatpush.msra.mxu0 0.0
        %1642 = vmatpush.msra.mxu0 0.0
        %1643 = vmatpush.msra.mxu0 0.0
        %1644 = vmatpush.msra.mxu0 0.0
        %1645 = vmatpush.msra.mxu0 0.0
        %1646 = vmatpush.msra.mxu0 0.0
        %1647 = vmatpush.msra.mxu0 0.0
        %1648 = vmatpush.msra.mxu0 0.0
        %1649 = vmatpush.msra.mxu0 0.0
        %1650 = vmatpush.msra.mxu0 0.0
        %1651 = vmatpush.msra.mxu0 %v1631
        %1652 = vmatmul.f32.gmra.mxu0 %v1628
        %v1653 = vpop.f32.mrf.mxu0
        %v1654 = vadd.f32 0.0, %v1653
        %1655 = vdwg.mxu0
        %1656 = vmatpush.msra.mxu0 0.0
        %1657 = vmatpush.msra.mxu0 0.0
        %1658 = vmatpush.msra.mxu0 0.0
        %1659 = vmatpush.msra.mxu0 0.0
        %1660 = vmatpush.msra.mxu0 0.0
        %1661 = vmatpush.msra.mxu0 0.0
        %1662 = vmatpush.msra.mxu0 0.0
        %1663 = vmatpush.msra.mxu0 0.0
        %1664 = vmatpush.msra.mxu0 0.0
        %1665 = vmatpush.msra.mxu0 0.0
        %1666 = vmatpush.msra.mxu0 0.0
        %1667 = vmatpush.msra.mxu0 0.0
        %1668 = vmatpush.msra.mxu0 0.0
        %1669 = vmatpush.msra.mxu0 0.0
        %1670 = vmatpush.msra.mxu0 0.0
        %1671 = vmatpush.msra.mxu0 %v1634
        %1672 = vmatmul.f32.gmra.mxu0 %v1628
        %v1673 = vpop.f32.mrf.mxu0
        %v1674 = vadd.f32 0.0, %v1673
        %1675 = vdwg.mxu0
        %v1676 = vadd.f32 %v1624, %v1654
        %v1677 = vadd.f32 %v1625, %v1674
        %v1679 = vperm.slane %v1246, %v1368
        %v1680 = vsel %vm1370, %v1679, 0
        %v1683 = vsel %vm1373, %v1364, 0
        %v1686 = vsel %vm1373, %v1365, 0
        %1688 = vmatpush.msra.mxu0 0.0
        %1689 = vmatpush.msra.mxu0 0.0
        %1690 = vmatpush.msra.mxu0 0.0
        %1691 = vmatpush.msra.mxu0 0.0
        %1692 = vmatpush.msra.mxu0 0.0
        %1693 = vmatpush.msra.mxu0 0.0
        %1694 = vmatpush.msra.mxu0 0.0
        %1695 = vmatpush.msra.mxu0 0.0
        %1696 = vmatpush.msra.mxu0 0.0
        %1697 = vmatpush.msra.mxu0 0.0
        %1698 = vmatpush.msra.mxu0 0.0
        %1699 = vmatpush.msra.mxu0 0.0
        %1700 = vmatpush.msra.mxu0 0.0
        %1701 = vmatpush.msra.mxu0 0.0
        %1702 = vmatpush.msra.mxu0 0.0
        %1703 = vmatpush.msra.mxu0 %v1683
        %1704 = vmatmul.f32.gmra.mxu0 %v1680
        %v1705 = vpop.f32.mrf.mxu0
        %v1706 = vadd.f32 0.0, %v1705
        %1707 = vdwg.mxu0
        %1708 = vmatpush.msra.mxu0 0.0
        %1709 = vmatpush.msra.mxu0 0.0
        %1710 = vmatpush.msra.mxu0 0.0
        %1711 = vmatpush.msra.mxu0 0.0
        %1712 = vmatpush.msra.mxu0 0.0
        %1713 = vmatpush.msra.mxu0 0.0
        %1714 = vmatpush.msra.mxu0 0.0
        %1715 = vmatpush.msra.mxu0 0.0
        %1716 = vmatpush.msra.mxu0 0.0
        %1717 = vmatpush.msra.mxu0 0.0
        %1718 = vmatpush.msra.mxu0 0.0
        %1719 = vmatpush.msra.mxu0 0.0
        %1720 = vmatpush.msra.mxu0 0.0
        %1721 = vmatpush.msra.mxu0 0.0
        %1722 = vmatpush.msra.mxu0 0.0
        %1723 = vmatpush.msra.mxu0 %v1686
        %1724 = vmatmul.f32.gmra.mxu0 %v1680
        %v1725 = vpop.f32.mrf.mxu0
        %v1726 = vadd.f32 0.0, %v1725
        %1727 = vdwg.mxu0
        %v1728 = vadd.f32 %v1676, %v1706
        %v1729 = vadd.f32 %v1677, %v1726
        %v1732 = vrot.slane %v1729, 7
        %vm1733 = vcmask 1040384
        %v1734 = vsel %vm1733, %v1728, %v1732
        %v1736 = vlaneseq
        %vm1737 = vcmp.ge.s32.totalorder %v1736, 0
        %vm1738 = vcmp.lt.s32.totalorder %v1736, 196
        %vm1739 = vmand %vm1737, %vm1738
        %1740 = vst.msk [vmem:[%s235] sm:$0x3] %vm1739, %v1734
        %v1742 = vperm.slane %v1276, %v1368
        %v1743 = vsel %vm1370, %v1742, 0
        %1745 = vmatpush.msra.mxu0 0.0
        %1746 = vmatpush.msra.mxu0 0.0
        %1747 = vmatpush.msra.mxu0 0.0
        %1748 = vmatpush.msra.mxu0 0.0
        %1749 = vmatpush.msra.mxu0 0.0
        %1750 = vmatpush.msra.mxu0 0.0
        %1751 = vmatpush.msra.mxu0 0.0
        %1752 = vmatpush.msra.mxu0 0.0
        %1753 = vmatpush.msra.mxu0 0.0
        %1754 = vmatpush.msra.mxu0 0.0
        %1755 = vmatpush.msra.mxu0 0.0
        %1756 = vmatpush.msra.mxu0 0.0
        %1757 = vmatpush.msra.mxu0 0.0
        %1758 = vmatpush.msra.mxu0 0.0
        %1759 = vmatpush.msra.mxu0 0.0
        %1760 = vmatpush.msra.mxu0 %v1375
        %1761 = vmatmul.f32.gmra.mxu0 %v1743
        %v1762 = vpop.f32.mrf.mxu0
        %v1763 = vadd.f32 0.0, %v1762
        %1764 = vdwg.mxu0
        %1765 = vmatpush.msra.mxu0 0.0
        %1766 = vmatpush.msra.mxu0 0.0
        %1767 = vmatpush.msra.mxu0 0.0
        %1768 = vmatpush.msra.mxu0 0.0
        %1769 = vmatpush.msra.mxu0 0.0
        %1770 = vmatpush.msra.mxu0 0.0
        %1771 = vmatpush.msra.mxu0 0.0
        %1772 = vmatpush.msra.mxu0 0.0
        %1773 = vmatpush.msra.mxu0 0.0
        %1774 = vmatpush.msra.mxu0 0.0
        %1775 = vmatpush.msra.mxu0 0.0
        %1776 = vmatpush.msra.mxu0 0.0
        %1777 = vmatpush.msra.mxu0 0.0
        %1778 = vmatpush.msra.mxu0 0.0
        %1779 = vmatpush.msra.mxu0 0.0
        %1780 = vmatpush.msra.mxu0 %v1378
        %1781 = vmatmul.f32.gmra.mxu0 %v1743
        %v1782 = vpop.f32.mrf.mxu0
        %v1783 = vadd.f32 0.0, %v1782
        %1784 = vdwg.mxu0
        %v1786 = vperm.slane %v1261, %v1368
        %v1787 = vsel %vm1370, %v1786, 0
        %1789 = vmatpush.msra.mxu0 0.0
        %1790 = vmatpush.msra.mxu0 0.0
        %1791 = vmatpush.msra.mxu0 0.0
        %1792 = vmatpush.msra.mxu0 0.0
        %1793 = vmatpush.msra.mxu0 0.0
        %1794 = vmatpush.msra.mxu0 0.0
        %1795 = vmatpush.msra.mxu0 0.0
        %1796 = vmatpush.msra.mxu0 0.0
        %1797 = vmatpush.msra.mxu0 0.0
        %1798 = vmatpush.msra.mxu0 0.0
        %1799 = vmatpush.msra.mxu0 0.0
        %1800 = vmatpush.msra.mxu0 0.0
        %1801 = vmatpush.msra.mxu0 0.0
        %1802 = vmatpush.msra.mxu0 0.0
        %1803 = vmatpush.msra.mxu0 0.0
        %1804 = vmatpush.msra.mxu0 %v1425
        %1805 = vmatmul.f32.gmra.mxu0 %v1787
        %v1806 = vpop.f32.mrf.mxu0
        %v1807 = vadd.f32 %v1763, %v1806
        %1808 = vdwg.mxu0
        %1809 = vmatpush.msra.mxu0 0.0
        %1810 = vmatpush.msra.mxu0 0.0
        %1811 = vmatpush.msra.mxu0 0.0
        %1812 = vmatpush.msra.mxu0 0.0
        %1813 = vmatpush.msra.mxu0 0.0
        %1814 = vmatpush.msra.mxu0 0.0
        %1815 = vmatpush.msra.mxu0 0.0
        %1816 = vmatpush.msra.mxu0 0.0
        %1817 = vmatpush.msra.mxu0 0.0
        %1818 = vmatpush.msra.mxu0 0.0
        %1819 = vmatpush.msra.mxu0 0.0
        %1820 = vmatpush.msra.mxu0 0.0
        %1821 = vmatpush.msra.mxu0 0.0
        %1822 = vmatpush.msra.mxu0 0.0
        %1823 = vmatpush.msra.mxu0 0.0
        %1824 = vmatpush.msra.mxu0 %v1428
        %1825 = vmatmul.f32.gmra.mxu0 %v1787
        %v1826 = vpop.f32.mrf.mxu0
        %v1827 = vadd.f32 %v1783, %v1826
        %1828 = vdwg.mxu0
        %v1830 = vperm.slane %v1291, %v1368
        %v1831 = vsel %vm1370, %v1830, 0
        %1833 = vmatpush.msra.mxu0 0.0
        %1834 = vmatpush.msra.mxu0 0.0
        %1835 = vmatpush.msra.mxu0 0.0
        %1836 = vmatpush.msra.mxu0 0.0
        %1837 = vmatpush.msra.mxu0 0.0
        %1838 = vmatpush.msra.mxu0 0.0
        %1839 = vmatpush.msra.mxu0 0.0
        %1840 = vmatpush.msra.mxu0 0.0
        %1841 = vmatpush.msra.mxu0 0.0
        %1842 = vmatpush.msra.mxu0 0.0
        %1843 = vmatpush.msra.mxu0 0.0
        %1844 = vmatpush.msra.mxu0 0.0
        %1845 = vmatpush.msra.mxu0 0.0
        %1846 = vmatpush.msra.mxu0 0.0
        %1847 = vmatpush.msra.mxu0 0.0
        %1848 = vmatpush.msra.mxu0 %v1475
        %1849 = vmatmul.f32.gmra.mxu0 %v1831
        %v1850 = vpop.f32.mrf.mxu0
        %v1851 = vadd.f32 0.0, %v1850
        %1852 = vdwg.mxu0
        %1853 = vmatpush.msra.mxu0 0.0
        %1854 = vmatpush.msra.mxu0 0.0
        %1855 = vmatpush.msra.mxu0 0.0
        %1856 = vmatpush.msra.mxu0 0.0
        %1857 = vmatpush.msra.mxu0 0.0
        %1858 = vmatpush.msra.mxu0 0.0
        %1859 = vmatpush.msra.mxu0 0.0
        %1860 = vmatpush.msra.mxu0 0.0
        %1861 = vmatpush.msra.mxu0 0.0
        %1862 = vmatpush.msra.mxu0 0.0
        %1863 = vmatpush.msra.mxu0 0.0
        %1864 = vmatpush.msra.mxu0 0.0
        %1865 = vmatpush.msra.mxu0 0.0
        %1866 = vmatpush.msra.mxu0 0.0
        %1867 = vmatpush.msra.mxu0 0.0
        %1868 = vmatpush.msra.mxu0 %v1478
        %1869 = vmatmul.f32.gmra.mxu0 %v1831
        %v1870 = vpop.f32.mrf.mxu0
        %v1871 = vadd.f32 0.0, %v1870
        %1872 = vdwg.mxu0
        %v1873 = vadd.f32 %v1807, %v1851
        %v1874 = vadd.f32 %v1827, %v1871
        %v1876 = vperm.slane %v1306, %v1368
        %v1877 = vsel %vm1370, %v1876, 0
        %1879 = vmatpush.msra.mxu0 0.0
        %1880 = vmatpush.msra.mxu0 0.0
        %1881 = vmatpush.msra.mxu0 0.0
        %1882 = vmatpush.msra.mxu0 0.0
        %1883 = vmatpush.msra.mxu0 0.0
        %1884 = vmatpush.msra.mxu0 0.0
        %1885 = vmatpush.msra.mxu0 0.0
        %1886 = vmatpush.msra.mxu0 0.0
        %1887 = vmatpush.msra.mxu0 0.0
        %1888 = vmatpush.msra.mxu0 0.0
        %1889 = vmatpush.msra.mxu0 0.0
        %1890 = vmatpush.msra.mxu0 0.0
        %1891 = vmatpush.msra.mxu0 0.0
        %1892 = vmatpush.msra.mxu0 0.0
        %1893 = vmatpush.msra.mxu0 0.0
        %1894 = vmatpush.msra.mxu0 %v1527
        %1895 = vmatmul.f32.gmra.mxu0 %v1877
        %v1896 = vpop.f32.mrf.mxu0
        %v1897 = vadd.f32 0.0, %v1896
        %1898 = vdwg.mxu0
        %1899 = vmatpush.msra.mxu0 0.0
        %1900 = vmatpush.msra.mxu0 0.0
        %1901 = vmatpush.msra.mxu0 0.0
        %1902 = vmatpush.msra.mxu0 0.0
        %1903 = vmatpush.msra.mxu0 0.0
        %1904 = vmatpush.msra.mxu0 0.0
        %1905 = vmatpush.msra.mxu0 0.0
        %1906 = vmatpush.msra.mxu0 0.0
        %1907 = vmatpush.msra.mxu0 0.0
        %1908 = vmatpush.msra.mxu0 0.0
        %1909 = vmatpush.msra.mxu0 0.0
        %1910 = vmatpush.msra.mxu0 0.0
        %1911 = vmatpush.msra.mxu0 0.0
        %1912 = vmatpush.msra.mxu0 0.0
        %1913 = vmatpush.msra.mxu0 0.0
        %1914 = vmatpush.msra.mxu0 %v1530
        %1915 = vmatmul.f32.gmra.mxu0 %v1877
        %v1916 = vpop.f32.mrf.mxu0
        %v1917 = vadd.f32 0.0, %v1916
        %1918 = vdwg.mxu0
        %v1919 = vadd.f32 %v1873, %v1897
        %v1920 = vadd.f32 %v1874, %v1917
        %v1922 = vperm.slane %v1321, %v1368
        %v1923 = vsel %vm1370, %v1922, 0
        %1925 = vmatpush.msra.mxu0 0.0
        %1926 = vmatpush.msra.mxu0 0.0
        %1927 = vmatpush.msra.mxu0 0.0
        %1928 = vmatpush.msra.mxu0 0.0
        %1929 = vmatpush.msra.mxu0 0.0
        %1930 = vmatpush.msra.mxu0 0.0
        %1931 = vmatpush.msra.mxu0 0.0
        %1932 = vmatpush.msra.mxu0 0.0
        %1933 = vmatpush.msra.mxu0 0.0
        %1934 = vmatpush.msra.mxu0 0.0
        %1935 = vmatpush.msra.mxu0 0.0
        %1936 = vmatpush.msra.mxu0 0.0
        %1937 = vmatpush.msra.mxu0 0.0
        %1938 = vmatpush.msra.mxu0 0.0
        %1939 = vmatpush.msra.mxu0 0.0
        %1940 = vmatpush.msra.mxu0 %v1579
        %1941 = vmatmul.f32.gmra.mxu0 %v1923
        %v1942 = vpop.f32.mrf.mxu0
        %v1943 = vadd.f32 0.0, %v1942
        %1944 = vdwg.mxu0
        %1945 = vmatpush.msra.mxu0 0.0
        %1946 = vmatpush.msra.mxu0 0.0
        %1947 = vmatpush.msra.mxu0 0.0
        %1948 = vmatpush.msra.mxu0 0.0
        %1949 = vmatpush.msra.mxu0 0.0
        %1950 = vmatpush.msra.mxu0 0.0
        %1951 = vmatpush.msra.mxu0 0.0
        %1952 = vmatpush.msra.mxu0 0.0
        %1953 = vmatpush.msra.mxu0 0.0
        %1954 = vmatpush.msra.mxu0 0.0
        %1955 = vmatpush.msra.mxu0 0.0
        %1956 = vmatpush.msra.mxu0 0.0
        %1957 = vmatpush.msra.mxu0 0.0
        %1958 = vmatpush.msra.mxu0 0.0
        %1959 = vmatpush.msra.mxu0 0.0
        %1960 = vmatpush.msra.mxu0 %v1582
        %1961 = vmatmul.f32.gmra.mxu0 %v1923
        %v1962 = vpop.f32.mrf.mxu0
        %v1963 = vadd.f32 0.0, %v1962
        %1964 = vdwg.mxu0
        %v1965 = vadd.f32 %v1919, %v1943
        %v1966 = vadd.f32 %v1920, %v1963
        %v1968 = vperm.slane %v1336, %v1368
        %v1969 = vsel %vm1370, %v1968, 0
        %1971 = vmatpush.msra.mxu0 0.0
        %1972 = vmatpush.msra.mxu0 0.0
        %1973 = vmatpush.msra.mxu0 0.0
        %1974 = vmatpush.msra.mxu0 0.0
        %1975 = vmatpush.msra.mxu0 0.0
        %1976 = vmatpush.msra.mxu0 0.0
        %1977 = vmatpush.msra.mxu0 0.0
        %1978 = vmatpush.msra.mxu0 0.0
        %1979 = vmatpush.msra.mxu0 0.0
        %1980 = vmatpush.msra.mxu0 0.0
        %1981 = vmatpush.msra.mxu0 0.0
        %1982 = vmatpush.msra.mxu0 0.0
        %1983 = vmatpush.msra.mxu0 0.0
        %1984 = vmatpush.msra.mxu0 0.0
        %1985 = vmatpush.msra.mxu0 0.0
        %1986 = vmatpush.msra.mxu0 %v1631
        %1987 = vmatmul.f32.gmra.mxu0 %v1969
        %v1988 = vpop.f32.mrf.mxu0
        %v1989 = vadd.f32 0.0, %v1988
        %1990 = vdwg.mxu0
        %1991 = vmatpush.msra.mxu0 0.0
        %1992 = vmatpush.msra.mxu0 0.0
        %1993 = vmatpush.msra.mxu0 0.0
        %1994 = vmatpush.msra.mxu0 0.0
        %1995 = vmatpush.msra.mxu0 0.0
        %1996 = vmatpush.msra.mxu0 0.0
        %1997 = vmatpush.msra.mxu0 0.0
        %1998 = vmatpush.msra.mxu0 0.0
        %1999 = vmatpush.msra.mxu0 0.0
        %2000 = vmatpush.msra.mxu0 0.0
        %2001 = vmatpush.msra.mxu0 0.0
        %2002 = vmatpush.msra.mxu0 0.0
        %2003 = vmatpush.msra.mxu0 0.0
        %2004 = vmatpush.msra.mxu0 0.0
        %2005 = vmatpush.msra.mxu0 0.0
        %2006 = vmatpush.msra.mxu0 %v1634
        %2007 = vmatmul.f32.gmra.mxu0 %v1969
        %v2008 = vpop.f32.mrf.mxu0
        %v2009 = vadd.f32 0.0, %v2008
        %2010 = vdwg.mxu0
        %v2011 = vadd.f32 %v1965, %v1989
        %v2012 = vadd.f32 %v1966, %v2009
        %v2014 = vperm.slane %v1351, %v1368
        %v2015 = vsel %vm1370, %v2014, 0
        %2017 = vmatpush.msra.mxu0 0.0
        %2018 = vmatpush.msra.mxu0 0.0
        %2019 = vmatpush.msra.mxu0 0.0
        %2020 = vmatpush.msra.mxu0 0.0
        %2021 = vmatpush.msra.mxu0 0.0
        %2022 = vmatpush.msra.mxu0 0.0
        %2023 = vmatpush.msra.mxu0 0.0
        %2024 = vmatpush.msra.mxu0 0.0
        %2025 = vmatpush.msra.mxu0 0.0
        %2026 = vmatpush.msra.mxu0 0.0
        %2027 = vmatpush.msra.mxu0 0.0
        %2028 = vmatpush.msra.mxu0 0.0
        %2029 = vmatpush.msra.mxu0 0.0
        %2030 = vmatpush.msra.mxu0 0.0
        %2031 = vmatpush.msra.mxu0 0.0
        %2032 = vmatpush.msra.mxu0 %v1683
        %2033 = vmatmul.f32.gmra.mxu0 %v2015
        %v2034 = vpop.f32.mrf.mxu0
        %v2035 = vadd.f32 0.0, %v2034
        %2036 = vdwg.mxu0
        %2037 = vmatpush.msra.mxu0 0.0
        %2038 = vmatpush.msra.mxu0 0.0
        %2039 = vmatpush.msra.mxu0 0.0
        %2040 = vmatpush.msra.mxu0 0.0
        %2041 = vmatpush.msra.mxu0 0.0
        %2042 = vmatpush.msra.mxu0 0.0
        %2043 = vmatpush.msra.mxu0 0.0
        %2044 = vmatpush.msra.mxu0 0.0
        %2045 = vmatpush.msra.mxu0 0.0
        %2046 = vmatpush.msra.mxu0 0.0
        %2047 = vmatpush.msra.mxu0 0.0
        %2048 = vmatpush.msra.mxu0 0.0
        %2049 = vmatpush.msra.mxu0 0.0
        %2050 = vmatpush.msra.mxu0 0.0
        %2051 = vmatpush.msra.mxu0 0.0
        %2052 = vmatpush.msra.mxu0 %v1686
        %2053 = vmatmul.f32.gmra.mxu0 %v2015
        %v2054 = vpop.f32.mrf.mxu0
        %v2055 = vadd.f32 0.0, %v2054
        %2056 = vdwg.mxu0
        %v2057 = vadd.f32 %v2011, %v2035
        %v2058 = vadd.f32 %v2012, %v2055
        %v2061 = vrot.slane %v2058, 7
        %v2062 = vsel %vm1733, %v2057, %v2061
        %s2064 = scalar_lea.vmem %s235, 2 [#allocation3]
        %2065 = vst.msk [vmem:[%s2064] sm:$0x3] %vm1739, %v2062
        %v2066 = vld [vmem:[%s252] sm:$0x1]
        %v2067 = vld [vmem:[%s252 + $0x1] sm:$0x1]
        %vm2068 = vcmask 8192
        %v2069 = vsel %vm2068, %v2066, -inf
        %2070 = vmax.xlane.f32.xlu0 %v2069
        %v2071 = vpop.xlane.xlu0 %2070
        %v2072 = vsel %vm2068, %v2067, -inf
        %2073 = vmax.xlane.f32.xlu0 %v2072
        %v2074 = vpop.xlane.xlu0 %2073
        %v2075 = vsub.f32 %v2066, %v2071
        %v2076 = vsub.f32 %v2067, %v2074
        %v2077 = vmul.f32 %v2075, 1.442695
        %v2078 = vpow.pop %v2077
        %v2079 = vmul.f32 %v2076, 1.442695
        %v2080 = vpow.pop %v2079
        %v2081 = vsel %vm2068, %v2078, 0.0
        %2082 = vadd.xlane.f32.xlu0 %v2081
        %v2083 = vpop.xlane.xlu0 %2082
        %v2084 = vsel %vm2068, %v2080, 0.0
        %2085 = vadd.xlane.f32.xlu0 %v2084
        %v2086 = vpop.xlane.xlu0 %2085
        %v2087 = vrcp.pop %v2083
        %v2088 = vmul.f32 %v2083, %v2087
        %v2089 = vsub.f32 1.0, %v2088
        %v2090 = vmul.f32 %v2087, %v2089
        %v2091 = vadd.f32 %v2087, %v2090
        %vm2092 = vweird.f32 %v2083
        %vm2093 = vweird.f32 %v2087
        %vm2094 = vmor %vm2092, %vm2093
        %v2095 = vsel %vm2094, %v2087, %v2091
        %v2096 = vand.u32 2147483647, %v2083
        %vm2097 = vcmp.eq.f32.partialorder %v2096, 8.507059e+37
        %v2098 = vand.u32 %v2083, 2147483648
        %v2099 = vor.u32 1.1754944e-38, %v2098
        %v2100 = vsel %vm2097, %v2099, %v2095
        %v2101 = vrcp.pop %v2086
        %v2102 = vmul.f32 %v2086, %v2101
        %v2103 = vsub.f32 1.0, %v2102
        %v2104 = vmul.f32 %v2101, %v2103
        %v2105 = vadd.f32 %v2101, %v2104
        %vm2106 = vweird.f32 %v2086
        %vm2107 = vweird.f32 %v2101
        %vm2108 = vmor %vm2106, %vm2107
        %v2109 = vsel %vm2108, %v2101, %v2105
        %v2110 = vand.u32 2147483647, %v2086
        %vm2111 = vcmp.eq.f32.partialorder %v2110, 8.507059e+37
        %v2112 = vand.u32 %v2086, 2147483648
        %v2113 = vor.u32 1.1754944e-38, %v2112
        %v2114 = vsel %vm2111, %v2113, %v2109
        %v2115 = vmul.f32 %v2078, %v2100
        %v2116 = vmul.f32 %v2080, %v2114
        %2117 = vst.msk [vmem:[%s258] sm:$0x1] %vm2068, %v2115
        %2118 = vst.msk [vmem:[%s258 + $0x1] sm:$0x1] %vm2068, %v2116
        %s2119 = sand.u32 %s122, 1
        %s2120 = scalar_lea.sflag [#allocation4], %s2119
        %s2121 = sand.u32 %s122, 1
        %s2122 = smul.addr %s2121, 4
        %s2123 = scalar_lea.vmem [#allocation3], %s2122
        %s2124 = smul.u32 2, %s20
        %p2125 = scmp.lt.s32.totalorder %s2124, 3
        %s2126 = scalar_select %p2125, %s2124, 3
        %s2127 = scalar_lea.vmem %s5, %s2126
        // Predicated region
        $region37: #{tpu_custom_call.1} parent=35 // pred_check
          %p2128 = pneg %p132
        $region38: #{tpu_custom_call.1} parent=35 // pred_check_branch
          %2130 = sbr.rel (%p2128) target = $region40
        $region39: #{tpu_custom_call.1} parent=35 // pred_region
          %s2131 = smul.u32 2, %s20
          %2133 = vsyncadd %s2120, 0
          %s2134 = smul.addr %s2131, 2
          %s2135 = scalar_lea.hbm %s4, %s2134
          %s2136 = sshll.u32 %s2123, 4
          %s2137 = int_to_ptr.vmem [resolvable:$true] %s2136
          %s2138 = sshll.u32 %s2135, 4
          %s2139 = int_to_ptr.hbm [resolvable:$true] %s2138
          %2144 = dma.vmem_to_hbm [thread:$0]  %s2137, 64, %s2139, %s2120, 32, 32, 2
        $region40: #{tpu_custom_call.1} parent=35 // pred_fallthru
          _
        // Predicated region
        $region41: #{tpu_custom_call.1} parent=35 // pred_check
          %p2145 = pneg %p158
        $region42: #{tpu_custom_call.1} parent=35 // pred_check_branch
          %2147 = sbr.rel (%p2145) target = $region44
        $region43: #{tpu_custom_call.1} parent=35 // pred_region
          %s2148 = smul.u32 2, %s20
        $region44: #{tpu_custom_call.1} parent=35 // pred_fallthru
          _
      $region36: #{tpu_custom_call.1} parent=5 // pred_fallthru
        _
      %p2149 = scmp.le.s32.totalorder 2, %s15
      // Predicated region
      $region45: #{tpu_custom_call.1} parent=5 // pred_check
        %p2150 = pneg %p2149
      $region46: #{tpu_custom_call.1} parent=5 // pred_check_branch
        %2152 = sbr.rel (%p2150) target = $region48
      $region47: #{tpu_custom_call.1} parent=5 // pred_region
        %s2153 = ssub.s32 %s15, 2
        // Predicated region
        $region49: #{tpu_custom_call.1} parent=47 // pred_check
          %p2154 = pneg %p138
        $region50: #{tpu_custom_call.1} parent=47 // pred_check_branch
          %2156 = sbr.rel (%p2154) target = $region52
        $region51: #{tpu_custom_call.1} parent=47 // pred_region
          %s2157 = sand.u32 %s123, 1
          %s2158 = scalar_lea.sflag [#allocation4], %s2157
          %s2159 = sand.u32 %s123, 1
          %s2160 = smul.addr %s2159, 4
          %s2161 = scalar_lea.vmem [#allocation3], %s2160
          %2163 = dma.done %s2158, 64
        $region52: #{tpu_custom_call.1} parent=47 // pred_fallthru
          _
        // Predicated region
        $region53: #{tpu_custom_call.1} parent=47 // pred_check
          %p2164 = pneg %p164
        $region54: #{tpu_custom_call.1} parent=47 // pred_check_branch
          %2166 = sbr.rel (%p2164) target = $region56
        $region55: #{tpu_custom_call.1} parent=47 // pred_region
          %s2167 = smul.u32 2, %s21
          %p2168 = scmp.lt.s32.totalorder %s2167, 3
          %s2169 = scalar_select %p2168, %s2167, 3
          %s2170 = scalar_lea.vmem %s5, %s2169
        $region56: #{tpu_custom_call.1} parent=47 // pred_fallthru
          _
      $region48: #{tpu_custom_call.1} parent=5 // pred_fallthru
        _
    $region6: #{tpu_custom_call.1} parent=1 // loop_footer
      %s19 = sadd.s32 1, %s15
    $region7: #{tpu_custom_call.1} parent=1 // loop_footer_branch
      %14 = sbr.rel target = $region3
    $region8: #{tpu_custom_call.1} parent=1 // loop_exit
      _
    %2171 = vsyncpa [#allocation4], 1
    %s2172 = scalar_lea.sflag [#allocation4], 1
    %2173 = vsyncpa %s2172, 1

</llo_original>
